<compile_context>
chip_gen: v5e
topology: v5e:2x2
jax: 0.10.0
libtpu: 0.0.40
codegen_flags: <defaults>
</compile_context>

<pallas_src>
import functools

import jax
import jax.numpy as jnp
from jax import lax
from jax.experimental import pallas as pl
from jax.experimental.pallas import tpu as pltpu

SLOPE = 0.01  # nn.LeakyReLU(negative_slope=0.01)


def _leaky(v):
    return jnp.where(v >= 0, v, SLOPE * v)


def _resblock_kernel(x_ref, w1_ref, b1_ref, w2_ref, b2_ref, out_ref, xe_ref,
                     *, H, W, pad):
    # x_ref  : (1, C, N)      one batch element; C on sublanes, N = H*W on lanes
    # w*_ref : (9, Cout, Cin) tap-major weights, tap t = ky*3 + kx
    # b*_ref : (C, 1)
    # out_ref: (1, C, N)
    # xe_ref : (C, pad + N + pad) f32 VMEM scratch (flat zero-padded activations)
    C = x_ref.shape[1]
    N = H * W

    x = x_ref[0]                                    # (C, N) un-activated (residual)

    # Column index of each output pixel. dx = +/-1 taps must not read a
    # neighbouring row's pixel through the flat layout, so mask those columns.
    col = lax.broadcasted_iota(jnp.int32, (1, N), 1) % W
    mask_l = col >= 1                               # valid outputs for dx = -1
    mask_r = col <= W - 2                           # valid outputs for dx = +1

    # Zero the scratch: the flat pad regions implement the H-border zero padding.
    # (leaky_relu(0) == 0, so padding after the activation is equivalent.)
    xe_ref[...] = jnp.zeros(xe_ref.shape, jnp.float32)

    def conv3x3(w_ref, b_ref):
        # 3x3 "same" conv: accumulate 9 shifted (Cout, Cin) @ (Cin, N) matmuls
        # whose operands are lane-offset views of the padded scratch.
        acc = jnp.zeros((w_ref.shape[1], N), jnp.float32)
        for t in range(9):
            ky, kx = t // 3, t % 3
            s = (ky - 1) * W + (kx - 1)             # flat shift of this tap
            tap = xe_ref[:, pl.ds(pad + s, N)]      # (Cin, N)
            if kx == 0:
                tap = jnp.where(mask_l, tap, 0.0)
            elif kx == 2:
                tap = jnp.where(mask_r, tap, 0.0)
            acc = acc + jnp.dot(w_ref[t], tap,
                                preferred_element_type=jnp.float32)
        return acc + b_ref[...]                     # (Cout, 1) broadcast over lanes

    # conv1(leaky_relu(x))
    xe_ref[:, pl.ds(pad, N)] = _leaky(x)            # aligned interior store
    h = _leaky(conv3x3(w1_ref, b1_ref))

    # conv2(.)
    xe_ref[:, pl.ds(pad, N)] = h                    # pads stay zero
    y = conv3x3(w2_ref, b2_ref)

    # last_layer = Identity; residual add with the un-activated input.
    out_ref[0] = (x + y).astype(out_ref.dtype)      # lane-dense store


def resblock_forward(x_nchw, w1_oihw, b1, w2_oihw, b2):
    """Pallas ResBlock forward.  x_nchw: (B, C, H, W) float32 -> (B, C, H, W)."""
    B, C, H, W = x_nchw.shape
    assert w1_oihw.shape == (C, C, 3, 3) and w2_oihw.shape == (C, C, 3, 3)
    N = H * W
    pad = max(128, ((W + 1 + 127) // 128) * 128)    # >= W+1 and 128-aligned

    # Free reshapes (NCHW is contiguous in (B, C, H*W)); tiny one-time weight reorder.
    x_flat = x_nchw.reshape(B, C, N).astype(jnp.float32)
    w1k = jnp.transpose(w1_oihw.astype(jnp.float32), (2, 3, 0, 1)).reshape(9, C, C)
    w2k = jnp.transpose(w2_oihw.astype(jnp.float32), (2, 3, 0, 1)).reshape(9, C, C)
    b1r = b1.reshape(C, 1).astype(jnp.float32)
    b2r = b2.reshape(C, 1).astype(jnp.float32)

    kernel = functools.partial(_resblock_kernel, H=H, W=W, pad=pad)

    out_flat = pl.pallas_call(
        kernel,
        out_shape=jax.ShapeDtypeStruct((B, C, N), jnp.float32),
        grid_spec=pltpu.PrefetchScalarGridSpec(
            num_scalar_prefetch=0,
            grid=(B,),
            in_specs=[
                pl.BlockSpec((1, C, N), lambda b: (b, 0, 0)),
                pl.BlockSpec((9, C, C), lambda b: (0, 0, 0)),
                pl.BlockSpec((C, 1), lambda b: (0, 0)),
                pl.BlockSpec((9, C, C), lambda b: (0, 0, 0)),
                pl.BlockSpec((C, 1), lambda b: (0, 0)),
            ],
            out_specs=pl.BlockSpec((1, C, N), lambda b: (b, 0, 0)),
            scratch_shapes=[pltpu.VMEM((C, N + 2 * pad), jnp.float32)],
        ),
        compiler_params=pltpu.CompilerParams(
            dimension_semantics=("parallel",)),
    )(x_flat, w1k, b1r, w2k, b2r)

    return out_flat.reshape(B, C, H, W)


def resblock_reference(x, w1, b1, w2, b2):
    """Pure-JAX (XLA conv) reference, NCHW / OIHW, matches the PyTorch module."""
    h = _leaky(x)
    h = lax.conv_general_dilated(
        h, w1, (1, 1), ((1, 1), (1, 1)),
        dimension_numbers=('NCHW', 'OIHW', 'NCHW')) + b1.reshape(1, -1, 1, 1)
    h = _leaky(h)
    h = lax.conv_general_dilated(
        h, w2, (1, 1), ((1, 1), (1, 1)),
        dimension_numbers=('NCHW', 'OIHW', 'NCHW')) + b2.reshape(1, -1, 1, 1)
    return x + h


if __name__ == "__main__":
    key = jax.random.PRNGKey(0)
    B, C, H, W = 2, 4, 16, 16

    k_x, k_w1, k_b1, k_w2, k_b2 = jax.random.split(key, 5)
    x = jax.random.normal(k_x, (B, C, H, W), jnp.float32)
    # deterministic synthetic parameters (PyTorch shapes: Conv2d(C, C, 3, padding=1))
    w1 = 0.1 * jax.random.normal(k_w1, (C, C, 3, 3), jnp.float32)   # OIHW
    b1 = 0.1 * jax.random.normal(k_b1, (C,), jnp.float32)
    w2 = 0.1 * jax.random.normal(k_w2, (C, C, 3, 3), jnp.float32)   # OIHW
    b2 = 0.1 * jax.random.normal(k_b2, (C,), jnp.float32)

    out = resblock_forward(x, w1, b1, w2, b2)
    out = jax.block_until_ready(out)

    ref = resblock_reference(x, w1, b1, w2, b2)
    assert out.shape == (B, C, H, W)
    assert jnp.allclose(out, ref, atol=1e-3, rtol=1e-3), float(
        jnp.max(jnp.abs(out - ref)))

    print("KERNEL_OK")
</pallas_src>

<mosaic_0001>
module attributes {stable_mosaic.version = 11 : i64} {
  func.func @_resblock_kernel(%arg0: i32, %arg1: memref<1x4x256xf32, #tpu.memory_space<vmem>>, %arg2: memref<9x4x4xf32, #tpu.memory_space<vmem>>, %arg3: memref<4x1xf32, #tpu.memory_space<vmem>>, %arg4: memref<9x4x4xf32, #tpu.memory_space<vmem>>, %arg5: memref<4x1xf32, #tpu.memory_space<vmem>>, %arg6: memref<1x4x256xf32, #tpu.memory_space<vmem>>, %arg7: memref<4x512xf32, #tpu.memory_space<vmem>>) attributes {dimension_semantics = [#tpu.dimension_semantics<parallel>], iteration_bounds = array<i64: 2>, scalar_prefetch = 0 : i64, scratch_operands = 1 : i64, tpu.core_type = #tpu.core_type<tc>, window_params = [{transform_indices = @transform_0, window_bounds = array<i64: 1, 4, 256>}, {pipeline_mode = #tpu.pipeline_mode<synchronous>, transform_indices = @transform_1, window_bounds = array<i64: 9, 4, 4>}, {pipeline_mode = #tpu.pipeline_mode<synchronous>, transform_indices = @transform_2, window_bounds = array<i64: 4, 1>}, {pipeline_mode = #tpu.pipeline_mode<synchronous>, transform_indices = @transform_3, window_bounds = array<i64: 9, 4, 4>}, {pipeline_mode = #tpu.pipeline_mode<synchronous>, transform_indices = @transform_4, window_bounds = array<i64: 4, 1>}, {transform_indices = @transform_5, window_bounds = array<i64: 1, 4, 256>}]} {
    %c0 = arith.constant 0 : index
    %c0_0 = arith.constant 0 : index
    %c0_1 = arith.constant 0 : index
    %0 = vector.load %arg1[%c0, %c0_0, %c0_1] : memref<1x4x256xf32, #tpu.memory_space<vmem>>, vector<1x4x256xf32>
    %1 = vector.shape_cast %0 : vector<1x4x256xf32> to vector<4x256xf32>
    %2 = tpu.iota {dimensions = array<i32: 1>} : vector<1x256xi32>
    %c16_i32 = arith.constant 16 : i32
    %c0_i32 = arith.constant 0 : i32
    %3 = arith.cmpi eq, %c16_i32, %c0_i32 : i32
    %c1_i32 = arith.constant 1 : i32
    %4 = arith.select %3, %c1_i32, %c16_i32 : i32
    %5 = vector.broadcast %4 : i32 to vector<1x256xi32>
    %6 = arith.remsi %2, %5 : vector<1x256xi32>
    %c0_i32_2 = arith.constant 0 : i32
    %7 = vector.broadcast %c0_i32_2 : i32 to vector<1x256xi32>
    %8 = arith.cmpi ne, %6, %7 : vector<1x256xi32>
    %c0_i32_3 = arith.constant 0 : i32
    %9 = vector.broadcast %c0_i32_3 : i32 to vector<1x256xi32>
    %10 = arith.cmpi slt, %6, %9 : vector<1x256xi32>
    %c0_i32_4 = arith.constant 0 : i32
    %11 = arith.cmpi slt, %4, %c0_i32_4 : i32
    %12 = vector.broadcast %11 : i1 to vector<1x256xi1>
    %13 = vector.broadcast %12 : vector<1x256xi1> to vector<1x256xi1>
    %14 = arith.xori %10, %13 : vector<1x256xi1>
    %15 = arith.andi %14, %8 : vector<1x256xi1>
    %16 = vector.broadcast %4 : i32 to vector<1x256xi32>
    %17 = arith.addi %6, %16 : vector<1x256xi32>
    %18 = arith.select %15, %17, %6 : vector<1x256xi1>, vector<1x256xi32>
    %c1_i32_5 = arith.constant 1 : i32
    %19 = vector.broadcast %c1_i32_5 : i32 to vector<1x256xi32>
    %20 = arith.cmpi sge, %18, %19 : vector<1x256xi32>
    %c14_i32 = arith.constant 14 : i32
    %21 = vector.broadcast %c14_i32 : i32 to vector<1x256xi32>
    %22 = arith.cmpi sle, %18, %21 : vector<1x256xi32>
    %cst = arith.constant 0.000000e+00 : f32
    %23 = vector.broadcast %cst : f32 to vector<4x512xf32>
    %c0_6 = arith.constant 0 : index
    %c0_7 = arith.constant 0 : index
    %24 = vector.load %arg7[%c0_6, %c0_7] : memref<4x512xf32, #tpu.memory_space<vmem>>, vector<4x512xf32>
    tpu.vector_store %arg7[%c0_6, %c0_7], %23 {strides = array<i32>} : memref<4x512xf32, #tpu.memory_space<vmem>>, vector<4x512xf32>,
    %cst_8 = arith.constant 0.000000e+00 : f32
    %25 = vector.broadcast %cst_8 : f32 to vector<4x256xf32>
    %26 = arith.cmpf oge, %1, %25 : vector<4x256xf32>
    %cst_9 = arith.constant 0.00999999977 : f32
    %27 = vector.broadcast %cst_9 : f32 to vector<4x256xf32>
    %28 = arith.mulf %27, %1 : vector<4x256xf32>
    %29 = arith.select %26, %1, %28 : vector<4x256xi1>, vector<4x256xf32>
    %c0_10 = arith.constant 0 : index
    %c128 = arith.constant 128 : index
    %30 = vector.load %arg7[%c0_10, %c128] : memref<4x512xf32, #tpu.memory_space<vmem>>, vector<4x256xf32>
    tpu.vector_store %arg7[%c0_10, %c128], %29 {strides = array<i32>} : memref<4x512xf32, #tpu.memory_space<vmem>>, vector<4x256xf32>,
    %cst_11 = arith.constant 0.000000e+00 : f32
    %31 = vector.broadcast %cst_11 : f32 to vector<4x256xf32>
    %c0_12 = arith.constant 0 : index
    %c111 = arith.constant 111 : index
    %32 = vector.load %arg7[%c0_12, %c111] : memref<4x512xf32, #tpu.memory_space<vmem>>, vector<4x256xf32>
    %cst_13 = arith.constant 0.000000e+00 : f32
    %33 = vector.shape_cast %20 : vector<1x256xi1> to vector<1x256xi1>
    %34 = vector.broadcast %33 : vector<1x256xi1> to vector<4x256xi1>
    %35 = vector.broadcast %cst_13 : f32 to vector<4x256xf32>
    %36 = arith.select %34, %32, %35 : vector<4x256xi1>, vector<4x256xf32>
    %c0_14 = arith.constant 0 : index
    %c0_15 = arith.constant 0 : index
    %c0_16 = arith.constant 0 : index
    %37 = vector.load %arg2[%c0_14, %c0_15, %c0_16] : memref<9x4x4xf32, #tpu.memory_space<vmem>>, vector<1x4x4xf32>
    %38 = vector.shape_cast %37 : vector<1x4x4xf32> to vector<4x4xf32>
    %cst_17 = arith.constant dense<0.000000e+00> : vector<4x256xf32>
    %39 = tpu.matmul %38, %36, %cst_17 {dimension_numbers = #tpu.dot_dimension_numbers<[1], [0], [0], [1], [0, 0, 1, 1], [], []>} : vector<4x4xf32>, vector<4x256xf32>, vector<4x256xf32> -> vector<4x256xf32>
    %40 = arith.addf %31, %39 : vector<4x256xf32>
    %c0_18 = arith.constant 0 : index
    %c112 = arith.constant 112 : index
    %41 = vector.load %arg7[%c0_18, %c112] : memref<4x512xf32, #tpu.memory_space<vmem>>, vector<4x256xf32>
    %c1 = arith.constant 1 : index
    %c0_19 = arith.constant 0 : index
    %c0_20 = arith.constant 0 : index
    %42 = vector.load %arg2[%c1, %c0_19, %c0_20] : memref<9x4x4xf32, #tpu.memory_space<vmem>>, vector<1x4x4xf32>
    %43 = vector.shape_cast %42 : vector<1x4x4xf32> to vector<4x4xf32>
    %cst_21 = arith.constant dense<0.000000e+00> : vector<4x256xf32>
    %44 = tpu.matmul %43, %41, %cst_21 {dimension_numbers = #tpu.dot_dimension_numbers<[1], [0], [0], [1], [0, 0, 1, 1], [], []>} : vector<4x4xf32>, vector<4x256xf32>, vector<4x256xf32> -> vector<4x256xf32>
    %45 = arith.addf %40, %44 : vector<4x256xf32>
    %c0_22 = arith.constant 0 : index
    %c113 = arith.constant 113 : index
    %46 = vector.load %arg7[%c0_22, %c113] : memref<4x512xf32, #tpu.memory_space<vmem>>, vector<4x256xf32>
    %cst_23 = arith.constant 0.000000e+00 : f32
    %47 = vector.shape_cast %22 : vector<1x256xi1> to vector<1x256xi1>
    %48 = vector.broadcast %47 : vector<1x256xi1> to vector<4x256xi1>
    %49 = vector.broadcast %cst_23 : f32 to vector<4x256xf32>
    %50 = arith.select %48, %46, %49 : vector<4x256xi1>, vector<4x256xf32>
    %c2 = arith.constant 2 : index
    %c0_24 = arith.constant 0 : index
    %c0_25 = arith.constant 0 : index
    %51 = vector.load %arg2[%c2, %c0_24, %c0_25] : memref<9x4x4xf32, #tpu.memory_space<vmem>>, vector<1x4x4xf32>
    %52 = vector.shape_cast %51 : vector<1x4x4xf32> to vector<4x4xf32>
    %cst_26 = arith.constant dense<0.000000e+00> : vector<4x256xf32>
    %53 = tpu.matmul %52, %50, %cst_26 {dimension_numbers = #tpu.dot_dimension_numbers<[1], [0], [0], [1], [0, 0, 1, 1], [], []>} : vector<4x4xf32>, vector<4x256xf32>, vector<4x256xf32> -> vector<4x256xf32>
    %54 = arith.addf %45, %53 : vector<4x256xf32>
    %c0_27 = arith.constant 0 : index
    %c127 = arith.constant 127 : index
    %55 = vector.load %arg7[%c0_27, %c127] : memref<4x512xf32, #tpu.memory_space<vmem>>, vector<4x256xf32>
    %cst_28 = arith.constant 0.000000e+00 : f32
    %56 = vector.shape_cast %20 : vector<1x256xi1> to vector<1x256xi1>
    %57 = vector.broadcast %56 : vector<1x256xi1> to vector<4x256xi1>
    %58 = vector.broadcast %cst_28 : f32 to vector<4x256xf32>
    %59 = arith.select %57, %55, %58 : vector<4x256xi1>, vector<4x256xf32>
    %c3 = arith.constant 3 : index
    %c0_29 = arith.constant 0 : index
    %c0_30 = arith.constant 0 : index
    %60 = vector.load %arg2[%c3, %c0_29, %c0_30] : memref<9x4x4xf32, #tpu.memory_space<vmem>>, vector<1x4x4xf32>
    %61 = vector.shape_cast %60 : vector<1x4x4xf32> to vector<4x4xf32>
    %cst_31 = arith.constant dense<0.000000e+00> : vector<4x256xf32>
    %62 = tpu.matmul %61, %59, %cst_31 {dimension_numbers = #tpu.dot_dimension_numbers<[1], [0], [0], [1], [0, 0, 1, 1], [], []>} : vector<4x4xf32>, vector<4x256xf32>, vector<4x256xf32> -> vector<4x256xf32>
    %63 = arith.addf %54, %62 : vector<4x256xf32>
    %c0_32 = arith.constant 0 : index
    %c128_33 = arith.constant 128 : index
    %64 = vector.load %arg7[%c0_32, %c128_33] : memref<4x512xf32, #tpu.memory_space<vmem>>, vector<4x256xf32>
    %c4 = arith.constant 4 : index
    %c0_34 = arith.constant 0 : index
    %c0_35 = arith.constant 0 : index
    %65 = vector.load %arg2[%c4, %c0_34, %c0_35] : memref<9x4x4xf32, #tpu.memory_space<vmem>>, vector<1x4x4xf32>
    %66 = vector.shape_cast %65 : vector<1x4x4xf32> to vector<4x4xf32>
    %cst_36 = arith.constant dense<0.000000e+00> : vector<4x256xf32>
    %67 = tpu.matmul %66, %64, %cst_36 {dimension_numbers = #tpu.dot_dimension_numbers<[1], [0], [0], [1], [0, 0, 1, 1], [], []>} : vector<4x4xf32>, vector<4x256xf32>, vector<4x256xf32> -> vector<4x256xf32>
    %68 = arith.addf %63, %67 : vector<4x256xf32>
    %c0_37 = arith.constant 0 : index
    %c129 = arith.constant 129 : index
    %69 = vector.load %arg7[%c0_37, %c129] : memref<4x512xf32, #tpu.memory_space<vmem>>, vector<4x256xf32>
    %cst_38 = arith.constant 0.000000e+00 : f32
    %70 = vector.shape_cast %22 : vector<1x256xi1> to vector<1x256xi1>
    %71 = vector.broadcast %70 : vector<1x256xi1> to vector<4x256xi1>
    %72 = vector.broadcast %cst_38 : f32 to vector<4x256xf32>
    %73 = arith.select %71, %69, %72 : vector<4x256xi1>, vector<4x256xf32>
    %c5 = arith.constant 5 : index
    %c0_39 = arith.constant 0 : index
    %c0_40 = arith.constant 0 : index
    %74 = vector.load %arg2[%c5, %c0_39, %c0_40] : memref<9x4x4xf32, #tpu.memory_space<vmem>>, vector<1x4x4xf32>
    %75 = vector.shape_cast %74 : vector<1x4x4xf32> to vector<4x4xf32>
    %cst_41 = arith.constant dense<0.000000e+00> : vector<4x256xf32>
    %76 = tpu.matmul %75, %73, %cst_41 {dimension_numbers = #tpu.dot_dimension_numbers<[1], [0], [0], [1], [0, 0, 1, 1], [], []>} : vector<4x4xf32>, vector<4x256xf32>, vector<4x256xf32> -> vector<4x256xf32>
    %77 = arith.addf %68, %76 : vector<4x256xf32>
    %c0_42 = arith.constant 0 : index
    %c143 = arith.constant 143 : index
    %78 = vector.load %arg7[%c0_42, %c143] : memref<4x512xf32, #tpu.memory_space<vmem>>, vector<4x256xf32>
    %cst_43 = arith.constant 0.000000e+00 : f32
    %79 = vector.shape_cast %20 : vector<1x256xi1> to vector<1x256xi1>
    %80 = vector.broadcast %79 : vector<1x256xi1> to vector<4x256xi1>
    %81 = vector.broadcast %cst_43 : f32 to vector<4x256xf32>
    %82 = arith.select %80, %78, %81 : vector<4x256xi1>, vector<4x256xf32>
    %c6 = arith.constant 6 : index
    %c0_44 = arith.constant 0 : index
    %c0_45 = arith.constant 0 : index
    %83 = vector.load %arg2[%c6, %c0_44, %c0_45] : memref<9x4x4xf32, #tpu.memory_space<vmem>>, vector<1x4x4xf32>
    %84 = vector.shape_cast %83 : vector<1x4x4xf32> to vector<4x4xf32>
    %cst_46 = arith.constant dense<0.000000e+00> : vector<4x256xf32>
    %85 = tpu.matmul %84, %82, %cst_46 {dimension_numbers = #tpu.dot_dimension_numbers<[1], [0], [0], [1], [0, 0, 1, 1], [], []>} : vector<4x4xf32>, vector<4x256xf32>, vector<4x256xf32> -> vector<4x256xf32>
    %86 = arith.addf %77, %85 : vector<4x256xf32>
    %c0_47 = arith.constant 0 : index
    %c144 = arith.constant 144 : index
    %87 = vector.load %arg7[%c0_47, %c144] : memref<4x512xf32, #tpu.memory_space<vmem>>, vector<4x256xf32>
    %c7 = arith.constant 7 : index
    %c0_48 = arith.constant 0 : index
    %c0_49 = arith.constant 0 : index
    %88 = vector.load %arg2[%c7, %c0_48, %c0_49] : memref<9x4x4xf32, #tpu.memory_space<vmem>>, vector<1x4x4xf32>
    %89 = vector.shape_cast %88 : vector<1x4x4xf32> to vector<4x4xf32>
    %cst_50 = arith.constant dense<0.000000e+00> : vector<4x256xf32>
    %90 = tpu.matmul %89, %87, %cst_50 {dimension_numbers = #tpu.dot_dimension_numbers<[1], [0], [0], [1], [0, 0, 1, 1], [], []>} : vector<4x4xf32>, vector<4x256xf32>, vector<4x256xf32> -> vector<4x256xf32>
    %91 = arith.addf %86, %90 : vector<4x256xf32>
    %c0_51 = arith.constant 0 : index
    %c145 = arith.constant 145 : index
    %92 = vector.load %arg7[%c0_51, %c145] : memref<4x512xf32, #tpu.memory_space<vmem>>, vector<4x256xf32>
    %cst_52 = arith.constant 0.000000e+00 : f32
    %93 = vector.shape_cast %22 : vector<1x256xi1> to vector<1x256xi1>
    %94 = vector.broadcast %93 : vector<1x256xi1> to vector<4x256xi1>
    %95 = vector.broadcast %cst_52 : f32 to vector<4x256xf32>
    %96 = arith.select %94, %92, %95 : vector<4x256xi1>, vector<4x256xf32>
    %c8 = arith.constant 8 : index
    %c0_53 = arith.constant 0 : index
    %c0_54 = arith.constant 0 : index
    %97 = vector.load %arg2[%c8, %c0_53, %c0_54] : memref<9x4x4xf32, #tpu.memory_space<vmem>>, vector<1x4x4xf32>
    %98 = vector.shape_cast %97 : vector<1x4x4xf32> to vector<4x4xf32>
    %cst_55 = arith.constant dense<0.000000e+00> : vector<4x256xf32>
    %99 = tpu.matmul %98, %96, %cst_55 {dimension_numbers = #tpu.dot_dimension_numbers<[1], [0], [0], [1], [0, 0, 1, 1], [], []>} : vector<4x4xf32>, vector<4x256xf32>, vector<4x256xf32> -> vector<4x256xf32>
    %100 = arith.addf %91, %99 : vector<4x256xf32>
    %c0_56 = arith.constant 0 : index
    %c0_57 = arith.constant 0 : index
    %101 = vector.load %arg3[%c0_56, %c0_57] : memref<4x1xf32, #tpu.memory_space<vmem>>, vector<4x1xf32>
    %102 = vector.broadcast %101 : vector<4x1xf32> to vector<4x256xf32>
    %103 = arith.addf %100, %102 : vector<4x256xf32>
    %cst_58 = arith.constant 0.000000e+00 : f32
    %104 = vector.broadcast %cst_58 : f32 to vector<4x256xf32>
    %105 = arith.cmpf oge, %103, %104 : vector<4x256xf32>
    %cst_59 = arith.constant 0.00999999977 : f32
    %106 = vector.broadcast %cst_59 : f32 to vector<4x256xf32>
    %107 = arith.mulf %106, %103 : vector<4x256xf32>
    %108 = arith.select %105, %103, %107 : vector<4x256xi1>, vector<4x256xf32>
    %c0_60 = arith.constant 0 : index
    %c128_61 = arith.constant 128 : index
    %109 = vector.load %arg7[%c0_60, %c128_61] : memref<4x512xf32, #tpu.memory_space<vmem>>, vector<4x256xf32>
    tpu.vector_store %arg7[%c0_60, %c128_61], %108 {strides = array<i32>} : memref<4x512xf32, #tpu.memory_space<vmem>>, vector<4x256xf32>,
    %cst_62 = arith.constant 0.000000e+00 : f32
    %110 = vector.broadcast %cst_62 : f32 to vector<4x256xf32>
    %c0_63 = arith.constant 0 : index
    %c111_64 = arith.constant 111 : index
    %111 = vector.load %arg7[%c0_63, %c111_64] : memref<4x512xf32, #tpu.memory_space<vmem>>, vector<4x256xf32>
    %cst_65 = arith.constant 0.000000e+00 : f32
    %112 = vector.shape_cast %20 : vector<1x256xi1> to vector<1x256xi1>
    %113 = vector.broadcast %112 : vector<1x256xi1> to vector<4x256xi1>
    %114 = vector.broadcast %cst_65 : f32 to vector<4x256xf32>
    %115 = arith.select %113, %111, %114 : vector<4x256xi1>, vector<4x256xf32>
    %c0_66 = arith.constant 0 : index
    %c0_67 = arith.constant 0 : index
    %c0_68 = arith.constant 0 : index
    %116 = vector.load %arg4[%c0_66, %c0_67, %c0_68] : memref<9x4x4xf32, #tpu.memory_space<vmem>>, vector<1x4x4xf32>
    %117 = vector.shape_cast %116 : vector<1x4x4xf32> to vector<4x4xf32>
    %cst_69 = arith.constant dense<0.000000e+00> : vector<4x256xf32>
    %118 = tpu.matmul %117, %115, %cst_69 {dimension_numbers = #tpu.dot_dimension_numbers<[1], [0], [0], [1], [0, 0, 1, 1], [], []>} : vector<4x4xf32>, vector<4x256xf32>, vector<4x256xf32> -> vector<4x256xf32>
    %119 = arith.addf %110, %118 : vector<4x256xf32>
    %c0_70 = arith.constant 0 : index
    %c112_71 = arith.constant 112 : index
    %120 = vector.load %arg7[%c0_70, %c112_71] : memref<4x512xf32, #tpu.memory_space<vmem>>, vector<4x256xf32>
    %c1_72 = arith.constant 1 : index
    %c0_73 = arith.constant 0 : index
    %c0_74 = arith.constant 0 : index
    %121 = vector.load %arg4[%c1_72, %c0_73, %c0_74] : memref<9x4x4xf32, #tpu.memory_space<vmem>>, vector<1x4x4xf32>
    %122 = vector.shape_cast %121 : vector<1x4x4xf32> to vector<4x4xf32>
    %cst_75 = arith.constant dense<0.000000e+00> : vector<4x256xf32>
    %123 = tpu.matmul %122, %120, %cst_75 {dimension_numbers = #tpu.dot_dimension_numbers<[1], [0], [0], [1], [0, 0, 1, 1], [], []>} : vector<4x4xf32>, vector<4x256xf32>, vector<4x256xf32> -> vector<4x256xf32>
    %124 = arith.addf %119, %123 : vector<4x256xf32>
    %c0_76 = arith.constant 0 : index
    %c113_77 = arith.constant 113 : index
    %125 = vector.load %arg7[%c0_76, %c113_77] : memref<4x512xf32, #tpu.memory_space<vmem>>, vector<4x256xf32>
    %cst_78 = arith.constant 0.000000e+00 : f32
    %126 = vector.shape_cast %22 : vector<1x256xi1> to vector<1x256xi1>
    %127 = vector.broadcast %126 : vector<1x256xi1> to vector<4x256xi1>
    %128 = vector.broadcast %cst_78 : f32 to vector<4x256xf32>
    %129 = arith.select %127, %125, %128 : vector<4x256xi1>, vector<4x256xf32>
    %c2_79 = arith.constant 2 : index
    %c0_80 = arith.constant 0 : index
    %c0_81 = arith.constant 0 : index
    %130 = vector.load %arg4[%c2_79, %c0_80, %c0_81] : memref<9x4x4xf32, #tpu.memory_space<vmem>>, vector<1x4x4xf32>
    %131 = vector.shape_cast %130 : vector<1x4x4xf32> to vector<4x4xf32>
    %cst_82 = arith.constant dense<0.000000e+00> : vector<4x256xf32>
    %132 = tpu.matmul %131, %129, %cst_82 {dimension_numbers = #tpu.dot_dimension_numbers<[1], [0], [0], [1], [0, 0, 1, 1], [], []>} : vector<4x4xf32>, vector<4x256xf32>, vector<4x256xf32> -> vector<4x256xf32>
    %133 = arith.addf %124, %132 : vector<4x256xf32>
    %c0_83 = arith.constant 0 : index
    %c127_84 = arith.constant 127 : index
    %134 = vector.load %arg7[%c0_83, %c127_84] : memref<4x512xf32, #tpu.memory_space<vmem>>, vector<4x256xf32>
    %cst_85 = arith.constant 0.000000e+00 : f32
    %135 = vector.shape_cast %20 : vector<1x256xi1> to vector<1x256xi1>
    %136 = vector.broadcast %135 : vector<1x256xi1> to vector<4x256xi1>
    %137 = vector.broadcast %cst_85 : f32 to vector<4x256xf32>
    %138 = arith.select %136, %134, %137 : vector<4x256xi1>, vector<4x256xf32>
    %c3_86 = arith.constant 3 : index
    %c0_87 = arith.constant 0 : index
    %c0_88 = arith.constant 0 : index
    %139 = vector.load %arg4[%c3_86, %c0_87, %c0_88] : memref<9x4x4xf32, #tpu.memory_space<vmem>>, vector<1x4x4xf32>
    %140 = vector.shape_cast %139 : vector<1x4x4xf32> to vector<4x4xf32>
    %cst_89 = arith.constant dense<0.000000e+00> : vector<4x256xf32>
    %141 = tpu.matmul %140, %138, %cst_89 {dimension_numbers = #tpu.dot_dimension_numbers<[1], [0], [0], [1], [0, 0, 1, 1], [], []>} : vector<4x4xf32>, vector<4x256xf32>, vector<4x256xf32> -> vector<4x256xf32>
    %142 = arith.addf %133, %141 : vector<4x256xf32>
    %c0_90 = arith.constant 0 : index
    %c128_91 = arith.constant 128 : index
    %143 = vector.load %arg7[%c0_90, %c128_91] : memref<4x512xf32, #tpu.memory_space<vmem>>, vector<4x256xf32>
    %c4_92 = arith.constant 4 : index
    %c0_93 = arith.constant 0 : index
    %c0_94 = arith.constant 0 : index
    %144 = vector.load %arg4[%c4_92, %c0_93, %c0_94] : memref<9x4x4xf32, #tpu.memory_space<vmem>>, vector<1x4x4xf32>
    %145 = vector.shape_cast %144 : vector<1x4x4xf32> to vector<4x4xf32>
    %cst_95 = arith.constant dense<0.000000e+00> : vector<4x256xf32>
    %146 = tpu.matmul %145, %143, %cst_95 {dimension_numbers = #tpu.dot_dimension_numbers<[1], [0], [0], [1], [0, 0, 1, 1], [], []>} : vector<4x4xf32>, vector<4x256xf32>, vector<4x256xf32> -> vector<4x256xf32>
    %147 = arith.addf %142, %146 : vector<4x256xf32>
    %c0_96 = arith.constant 0 : index
    %c129_97 = arith.constant 129 : index
    %148 = vector.load %arg7[%c0_96, %c129_97] : memref<4x512xf32, #tpu.memory_space<vmem>>, vector<4x256xf32>
    %cst_98 = arith.constant 0.000000e+00 : f32
    %149 = vector.shape_cast %22 : vector<1x256xi1> to vector<1x256xi1>
    %150 = vector.broadcast %149 : vector<1x256xi1> to vector<4x256xi1>
    %151 = vector.broadcast %cst_98 : f32 to vector<4x256xf32>
    %152 = arith.select %150, %148, %151 : vector<4x256xi1>, vector<4x256xf32>
    %c5_99 = arith.constant 5 : index
    %c0_100 = arith.constant 0 : index
    %c0_101 = arith.constant 0 : index
    %153 = vector.load %arg4[%c5_99, %c0_100, %c0_101] : memref<9x4x4xf32, #tpu.memory_space<vmem>>, vector<1x4x4xf32>
    %154 = vector.shape_cast %153 : vector<1x4x4xf32> to vector<4x4xf32>
    %cst_102 = arith.constant dense<0.000000e+00> : vector<4x256xf32>
    %155 = tpu.matmul %154, %152, %cst_102 {dimension_numbers = #tpu.dot_dimension_numbers<[1], [0], [0], [1], [0, 0, 1, 1], [], []>} : vector<4x4xf32>, vector<4x256xf32>, vector<4x256xf32> -> vector<4x256xf32>
    %156 = arith.addf %147, %155 : vector<4x256xf32>
    %c0_103 = arith.constant 0 : index
    %c143_104 = arith.constant 143 : index
    %157 = vector.load %arg7[%c0_103, %c143_104] : memref<4x512xf32, #tpu.memory_space<vmem>>, vector<4x256xf32>
    %cst_105 = arith.constant 0.000000e+00 : f32
    %158 = vector.shape_cast %20 : vector<1x256xi1> to vector<1x256xi1>
    %159 = vector.broadcast %158 : vector<1x256xi1> to vector<4x256xi1>
    %160 = vector.broadcast %cst_105 : f32 to vector<4x256xf32>
    %161 = arith.select %159, %157, %160 : vector<4x256xi1>, vector<4x256xf32>
    %c6_106 = arith.constant 6 : index
    %c0_107 = arith.constant 0 : index
    %c0_108 = arith.constant 0 : index
    %162 = vector.load %arg4[%c6_106, %c0_107, %c0_108] : memref<9x4x4xf32, #tpu.memory_space<vmem>>, vector<1x4x4xf32>
    %163 = vector.shape_cast %162 : vector<1x4x4xf32> to vector<4x4xf32>
    %cst_109 = arith.constant dense<0.000000e+00> : vector<4x256xf32>
    %164 = tpu.matmul %163, %161, %cst_109 {dimension_numbers = #tpu.dot_dimension_numbers<[1], [0], [0], [1], [0, 0, 1, 1], [], []>} : vector<4x4xf32>, vector<4x256xf32>, vector<4x256xf32> -> vector<4x256xf32>
    %165 = arith.addf %156, %164 : vector<4x256xf32>
    %c0_110 = arith.constant 0 : index
    %c144_111 = arith.constant 144 : index
    %166 = vector.load %arg7[%c0_110, %c144_111] : memref<4x512xf32, #tpu.memory_space<vmem>>, vector<4x256xf32>
    %c7_112 = arith.constant 7 : index
    %c0_113 = arith.constant 0 : index
    %c0_114 = arith.constant 0 : index
    %167 = vector.load %arg4[%c7_112, %c0_113, %c0_114] : memref<9x4x4xf32, #tpu.memory_space<vmem>>, vector<1x4x4xf32>
    %168 = vector.shape_cast %167 : vector<1x4x4xf32> to vector<4x4xf32>
    %cst_115 = arith.constant dense<0.000000e+00> : vector<4x256xf32>
    %169 = tpu.matmul %168, %166, %cst_115 {dimension_numbers = #tpu.dot_dimension_numbers<[1], [0], [0], [1], [0, 0, 1, 1], [], []>} : vector<4x4xf32>, vector<4x256xf32>, vector<4x256xf32> -> vector<4x256xf32>
    %170 = arith.addf %165, %169 : vector<4x256xf32>
    %c0_116 = arith.constant 0 : index
    %c145_117 = arith.constant 145 : index
    %171 = vector.load %arg7[%c0_116, %c145_117] : memref<4x512xf32, #tpu.memory_space<vmem>>, vector<4x256xf32>
    %cst_118 = arith.constant 0.000000e+00 : f32
    %172 = vector.shape_cast %22 : vector<1x256xi1> to vector<1x256xi1>
    %173 = vector.broadcast %172 : vector<1x256xi1> to vector<4x256xi1>
    %174 = vector.broadcast %cst_118 : f32 to vector<4x256xf32>
    %175 = arith.select %173, %171, %174 : vector<4x256xi1>, vector<4x256xf32>
    %c8_119 = arith.constant 8 : index
    %c0_120 = arith.constant 0 : index
    %c0_121 = arith.constant 0 : index
    %176 = vector.load %arg4[%c8_119, %c0_120, %c0_121] : memref<9x4x4xf32, #tpu.memory_space<vmem>>, vector<1x4x4xf32>
    %177 = vector.shape_cast %176 : vector<1x4x4xf32> to vector<4x4xf32>
    %cst_122 = arith.constant dense<0.000000e+00> : vector<4x256xf32>
    %178 = tpu.matmul %177, %175, %cst_122 {dimension_numbers = #tpu.dot_dimension_numbers<[1], [0], [0], [1], [0, 0, 1, 1], [], []>} : vector<4x4xf32>, vector<4x256xf32>, vector<4x256xf32> -> vector<4x256xf32>
    %179 = arith.addf %170, %178 : vector<4x256xf32>
    %c0_123 = arith.constant 0 : index
    %c0_124 = arith.constant 0 : index
    %180 = vector.load %arg5[%c0_123, %c0_124] : memref<4x1xf32, #tpu.memory_space<vmem>>, vector<4x1xf32>
    %181 = vector.broadcast %180 : vector<4x1xf32> to vector<4x256xf32>
    %182 = arith.addf %179, %181 : vector<4x256xf32>
    %183 = arith.addf %1, %182 : vector<4x256xf32>
    %c0_125 = arith.constant 0 : index
    %c0_126 = arith.constant 0 : index
    %c0_127 = arith.constant 0 : index
    %184 = vector.load %arg6[%c0_125, %c0_126, %c0_127] : memref<1x4x256xf32, #tpu.memory_space<vmem>>, vector<1x4x256xf32>
    %185 = vector.shape_cast %184 : vector<1x4x256xf32> to vector<4x256xf32>
    %186 = vector.shape_cast %183 : vector<4x256xf32> to vector<1x4x256xf32>
    tpu.vector_store %arg6[%c0_125, %c0_126, %c0_127], %186 {strides = array<i32>} : memref<1x4x256xf32, #tpu.memory_space<vmem>>, vector<1x4x256xf32>,
    return
  }
  func.func @transform_0(%arg0: i32) -> (i32, i32, i32) {
    %c0_i32 = arith.constant 0 : i32
    %c0_i32_0 = arith.constant 0 : i32
    %c0_i32_1 = arith.constant 0 : i32
    return %arg0, %c0_i32, %c0_i32_0 : i32, i32, i32
  }
  func.func @transform_1(%arg0: i32) -> (i32, i32, i32) {
    %c0_i32 = arith.constant 0 : i32
    %c0_i32_0 = arith.constant 0 : i32
    %c0_i32_1 = arith.constant 0 : i32
    %c0_i32_2 = arith.constant 0 : i32
    return %c0_i32, %c0_i32_0, %c0_i32_1 : i32, i32, i32
  }
  func.func @transform_2(%arg0: i32) -> (i32, i32) {
    %c0_i32 = arith.constant 0 : i32
    %c0_i32_0 = arith.constant 0 : i32
    %c0_i32_1 = arith.constant 0 : i32
    return %c0_i32, %c0_i32_0 : i32, i32
  }
  func.func @transform_3(%arg0: i32) -> (i32, i32, i32) {
    %c0_i32 = arith.constant 0 : i32
    %c0_i32_0 = arith.constant 0 : i32
    %c0_i32_1 = arith.constant 0 : i32
    %c0_i32_2 = arith.constant 0 : i32
    return %c0_i32, %c0_i32_0, %c0_i32_1 : i32, i32, i32
  }
  func.func @transform_4(%arg0: i32) -> (i32, i32) {
    %c0_i32 = arith.constant 0 : i32
    %c0_i32_0 = arith.constant 0 : i32
    %c0_i32_1 = arith.constant 0 : i32
    return %c0_i32, %c0_i32_0 : i32, i32
  }
  func.func @transform_5(%arg0: i32) -> (i32, i32, i32) {
    %c0_i32 = arith.constant 0 : i32
    %c0_i32_0 = arith.constant 0 : i32
    %c0_i32_1 = arith.constant 0 : i32
    return %arg0, %c0_i32, %c0_i32_0 : i32, i32, i32
  }
}

</mosaic_0001>

<llo_original>
// kernel: tpu_custom_call.1
$region0: #{tpu_custom_call.1}
  #allocation0 [shape = 'u32[]', space=smem, size = 0x4, offset = 0x4, fixed_abs, tag = 'smem constant byte address 0x4 - core index']
  #allocation1 [shape = 'u32[72,128]{1,0:T(1,128)}', space=vmem, size = 0x9000, scoped, tag = 'internal scratch']
  #allocation2 [shape = 'f32[4,512]{1,0:T(4,128)}', space=vmem, size = 0x2000, scoped, tag = 'scratch operand']
  %s0 = inlined_call_operand.vmem [shape: f32[2,4,256], index: 0, kind: input, shape index: {}]
  %s1 = inlined_call_operand.vmem [shape: f32[9,4,4], index: 1, kind: input, shape index: {}]
  %s2 = inlined_call_operand.vmem [shape: f32[4,1], index: 2, kind: input, shape index: {}]
  %s3 = inlined_call_operand.vmem [shape: f32[9,4,4], index: 3, kind: input, shape index: {}]
  %s4 = inlined_call_operand.vmem [shape: f32[4,1], index: 4, kind: input, shape index: {}]
  %s5 = inlined_call_operand.hbm [shape: f32[2,4,256], index: 5, kind: output, shape index: {}]
  %s6 = sld [smem:[#allocation0]]
  $region53: #{tpu_custom_call.1} parent=0
    _
  %s8 = ssub.s32 1, %s6
  %s9 = scalar_select 0, %s8, %s6
  $region1: #{tpu_custom_call.1} parent=0
    #allocation3 [shape = 'u8[8192]{0}', space=vmem, size = 0x2000, scoped, tag = 'output window, operand 0']
    #allocation4 [shape = 's32[2]{0}', space=sflag, size = 0x8, scoped, tag = 'scoped memory for tpu_custom_call.1']
    %10 = vsyncpa [#allocation4], 0
    %s11 = scalar_lea.sflag [#allocation4], 1
    %12 = vsyncpa %s11, 0
    loop: start=0, step=1, limit=4
    $region2: #{tpu_custom_call.1} parent=1 // loop_pre_header
      _
    $region3: #{tpu_custom_call.1} parent=1 // loop_header
      %s14 = sphi 0, %s18
      %p15 = scmp.ge.s32.totalorder %s14, 4
      %s24 = sphi 0, %s26
      %s27 = sphi 0, %s24
      %s28 = sphi 0, %s27
      %s44 = sphi 0, %s28
      %s48 = sphi 0, %s48
      %s50 = sphi 0, %s48
      %s51 = sphi 0, %s50
      %s65 = sphi 0, %s51
      %s69 = sphi 0, %s69
      %s71 = sphi 0, %s69
      %s72 = sphi 0, %s71
      %s86 = sphi 0, %s72
      %s90 = sphi 0, %s90
      %s92 = sphi 0, %s90
      %s93 = sphi 0, %s92
      %s107 = sphi 0, %s93
      %s111 = sphi 0, %s111
      %s113 = sphi 0, %s111
      %s114 = sphi 0, %s113
      %s128 = sphi 0, %s114
      %s134 = sphi 0, %s136
      %s137 = sphi 0, %s134
      %s138 = sphi 0, %s137
      %s154 = sphi 0, %s138
    $region4: #{tpu_custom_call.1} parent=1 // loop_header_branch
      %17 = sbr.rel (%p15) target = $region8
    $region5: #{tpu_custom_call.1} parent=1 // loop_body
      %s19 = ssub.s32 %s14, 1
      %s20 = ssub.s32 %s14, 2
      %s21 = sadd.s32 %s14, 1
      %s22 = ssub.s32 %s14, %s21
      %p23 = scmp.eq.s32.totalorder %s22, 0
      %s25 = sadd.s32 %s24, 1
      %s26 = scalar_select %p23, %s24, %s25
      %p29 = pneg %p23
      %p30 = scmp.eq.s32.totalorder %s14, 1
      %p31 = por %p29, %p30
      %p32 = scmp.ne.s32.totalorder %s24, %s27
      %p33 = scmp.eq.s32.totalorder %s14, 0
      %p34 = por %p32, %p33
      %p35 = scmp.ne.s32.totalorder %s24, %s27
      %p36 = scmp.eq.s32.totalorder %s19, 1
      %p37 = por %p35, %p36
      %p38 = scmp.ne.s32.totalorder %s27, %s28
      %p39 = scmp.eq.s32.totalorder %s19, 0
      %p40 = por %p38, %p39
      %p41 = scmp.ne.s32.totalorder %s27, %s28
      %p42 = scmp.eq.s32.totalorder %s20, 1
      %p43 = por %p41, %p42
      %p45 = scmp.ne.s32.totalorder %s28, %s44
      %p46 = scmp.eq.s32.totalorder %s20, 0
      %p47 = por %p45, %p46
      %s49 = sadd.s32 %s48, 1
      %p52 = scmp.eq.s32.totalorder %s14, 1
      %p53 = scmp.ne.s32.totalorder %s48, %s50
      %p54 = scmp.eq.s32.totalorder %s14, 0
      %p55 = por %p53, %p54
      %p56 = scmp.ne.s32.totalorder %s48, %s50
      %p57 = scmp.eq.s32.totalorder %s19, 1
      %p58 = por %p56, %p57
      %p59 = scmp.ne.s32.totalorder %s50, %s51
      %p60 = scmp.eq.s32.totalorder %s19, 0
      %p61 = por %p59, %p60
      %p62 = scmp.ne.s32.totalorder %s50, %s51
      %p63 = scmp.eq.s32.totalorder %s20, 1
      %p64 = por %p62, %p63
      %p66 = scmp.ne.s32.totalorder %s51, %s65
      %p67 = scmp.eq.s32.totalorder %s20, 0
      %p68 = por %p66, %p67
      %s70 = sadd.s32 %s69, 1
      %p73 = scmp.eq.s32.totalorder %s14, 1
      %p74 = scmp.ne.s32.totalorder %s69, %s71
      %p75 = scmp.eq.s32.totalorder %s14, 0
      %p76 = por %p74, %p75
      %p77 = scmp.ne.s32.totalorder %s69, %s71
      %p78 = scmp.eq.s32.totalorder %s19, 1
      %p79 = por %p77, %p78
      %p80 = scmp.ne.s32.totalorder %s71, %s72
      %p81 = scmp.eq.s32.totalorder %s19, 0
      %p82 = por %p80, %p81
      %p83 = scmp.ne.s32.totalorder %s71, %s72
      %p84 = scmp.eq.s32.totalorder %s20, 1
      %p85 = por %p83, %p84
      %p87 = scmp.ne.s32.totalorder %s72, %s86
      %p88 = scmp.eq.s32.totalorder %s20, 0
      %p89 = por %p87, %p88
      %s91 = sadd.s32 %s90, 1
      %p94 = scmp.eq.s32.totalorder %s14, 1
      %p95 = scmp.ne.s32.totalorder %s90, %s92
      %p96 = scmp.eq.s32.totalorder %s14, 0
      %p97 = por %p95, %p96
      %p98 = scmp.ne.s32.totalorder %s90, %s92
      %p99 = scmp.eq.s32.totalorder %s19, 1
      %p100 = por %p98, %p99
      %p101 = scmp.ne.s32.totalorder %s92, %s93
      %p102 = scmp.eq.s32.totalorder %s19, 0
      %p103 = por %p101, %p102
      %p104 = scmp.ne.s32.totalorder %s92, %s93
      %p105 = scmp.eq.s32.totalorder %s20, 1
      %p106 = por %p104, %p105
      %p108 = scmp.ne.s32.totalorder %s93, %s107
      %p109 = scmp.eq.s32.totalorder %s20, 0
      %p110 = por %p108, %p109
      %s112 = sadd.s32 %s111, 1
      %p115 = scmp.eq.s32.totalorder %s14, 1
      %p116 = scmp.ne.s32.totalorder %s111, %s113
      %p117 = scmp.eq.s32.totalorder %s14, 0
      %p118 = por %p116, %p117
      %p119 = scmp.ne.s32.totalorder %s111, %s113
      %p120 = scmp.eq.s32.totalorder %s19, 1
      %p121 = por %p119, %p120
      %p122 = scmp.ne.s32.totalorder %s113, %s114
      %p123 = scmp.eq.s32.totalorder %s19, 0
      %p124 = por %p122, %p123
      %p125 = scmp.ne.s32.totalorder %s113, %s114
      %p126 = scmp.eq.s32.totalorder %s20, 1
      %p127 = por %p125, %p126
      %p129 = scmp.ne.s32.totalorder %s114, %s128
      %p130 = scmp.eq.s32.totalorder %s20, 0
      %p131 = por %p129, %p130
      %s132 = ssub.s32 %s14, %s21
      %p133 = scmp.eq.s32.totalorder %s132, 0
      %s135 = sadd.s32 %s134, 1
      %s136 = scalar_select %p133, %s134, %s135
      %p139 = pneg %p133
      %p140 = scmp.eq.s32.totalorder %s14, 1
      %p141 = por %p139, %p140
      %p142 = scmp.ne.s32.totalorder %s134, %s137
      %p143 = scmp.eq.s32.totalorder %s14, 0
      %p144 = por %p142, %p143
      %p145 = scmp.ne.s32.totalorder %s134, %s137
      %p146 = scmp.eq.s32.totalorder %s19, 1
      %p147 = por %p145, %p146
      %p148 = scmp.ne.s32.totalorder %s137, %s138
      %p149 = scmp.eq.s32.totalorder %s19, 0
      %p150 = por %p148, %p149
      %p151 = scmp.ne.s32.totalorder %s137, %s138
      %p152 = scmp.eq.s32.totalorder %s20, 1
      %p153 = por %p151, %p152
      %p155 = scmp.ne.s32.totalorder %s138, %s154
      %p156 = scmp.eq.s32.totalorder %s20, 0
      %p157 = por %p155, %p156
      %p158 = scmp.le.s32.totalorder 1, %s14
      %p159 = scmp.lt.s32.totalorder %s14, 3
      %p160 = pnand %p158, %p159
      %p161 = pneg %p160
      // Predicated region
      $region9: #{tpu_custom_call.1} parent=5 // pred_check
        _
      $region10: #{tpu_custom_call.1} parent=5 // pred_check_branch
        %163 = sbr.rel (%p160) target = $region12
      $region11: #{tpu_custom_call.1} parent=5 // pred_region
        %s164 = ssub.s32 %s14, 1
        // Predicated region
        $region13: #{tpu_custom_call.1} parent=11 // pred_check
          %p165 = pneg %p61
        $region14: #{tpu_custom_call.1} parent=11 // pred_check_branch
          %167 = sbr.rel (%p165) target = $region16
        $region15: #{tpu_custom_call.1} parent=11 // pred_region
          _
        $region16: #{tpu_custom_call.1} parent=11 // pred_fallthru
          _
        // Predicated region
        $region17: #{tpu_custom_call.1} parent=11 // pred_check
          %p168 = pneg %p82
        $region18: #{tpu_custom_call.1} parent=11 // pred_check_branch
          %170 = sbr.rel (%p168) target = $region20
        $region19: #{tpu_custom_call.1} parent=11 // pred_region
          _
        $region20: #{tpu_custom_call.1} parent=11 // pred_fallthru
          _
        // Predicated region
        $region21: #{tpu_custom_call.1} parent=11 // pred_check
          %p171 = pneg %p103
        $region22: #{tpu_custom_call.1} parent=11 // pred_check_branch
          %173 = sbr.rel (%p171) target = $region24
        $region23: #{tpu_custom_call.1} parent=11 // pred_region
          _
        $region24: #{tpu_custom_call.1} parent=11 // pred_fallthru
          _
        // Predicated region
        $region25: #{tpu_custom_call.1} parent=11 // pred_check
          %p174 = pneg %p124
        $region26: #{tpu_custom_call.1} parent=11 // pred_check_branch
          %176 = sbr.rel (%p174) target = $region28
        $region27: #{tpu_custom_call.1} parent=11 // pred_region
          _
        $region28: #{tpu_custom_call.1} parent=11 // pred_fallthru
          _
      $region12: #{tpu_custom_call.1} parent=5 // pred_fallthru
        _
      %p177 = scmp.lt.s32.totalorder %s14, 2
      // Predicated region
      $region29: #{tpu_custom_call.1} parent=5 // pred_check
        %p178 = pneg %p177
      $region30: #{tpu_custom_call.1} parent=5 // pred_check_branch
        %180 = sbr.rel (%p178) target = $region32
      $region31: #{tpu_custom_call.1} parent=5 // pred_region
        // Predicated region
        $region33: #{tpu_custom_call.1} parent=31 // pred_check
          %p181 = pneg %p34
        $region34: #{tpu_custom_call.1} parent=31 // pred_check_branch
          %183 = sbr.rel (%p181) target = $region36
        $region35: #{tpu_custom_call.1} parent=31 // pred_region
          %p184 = scmp.lt.s32.totalorder %s14, 1
          %s185 = scalar_select %p184, %s14, 1
          %s186 = smul.addr %s185, 2
          %s187 = smul.addr %s186, 4
          %s188 = scalar_lea.vmem %s0, %s187
        $region36: #{tpu_custom_call.1} parent=31 // pred_fallthru
          _
      $region32: #{tpu_custom_call.1} parent=5 // pred_fallthru
        _
      %p189 = scmp.le.s32.totalorder 1, %s14
      %p190 = scmp.lt.s32.totalorder %s14, 3
      %p191 = pnand %p189, %p190
      %p192 = pneg %p191
      // Predicated region
      $region37: #{tpu_custom_call.1} parent=5 // pred_check
        _
      $region38: #{tpu_custom_call.1} parent=5 // pred_check_branch
        %194 = sbr.rel (%p191) target = $region40
      $region39: #{tpu_custom_call.1} parent=5 // pred_region
        %s195 = ssub.s32 %s14, 1
        %p196 = scmp.lt.s32.totalorder %s19, 1
        %s197 = scalar_select %p196, %s19, 1
        %s198 = smul.addr %s197, 2
        %s199 = smul.addr %s198, 4
        %s200 = scalar_lea.vmem %s0, %s199
        %p201 = pneg %p40
        %p202 = pneg %p37
        %p203 = pneg %p61
        %p204 = pneg %p58
        %p205 = pneg %p82
        %p206 = pneg %p79
        %p207 = pneg %p103
        %p208 = pneg %p100
        %p209 = pneg %p124
        %p210 = pneg %p121
        %p211 = pneg %p150
        %p212 = pneg %p147
        %s213 = sand.u32 %s137, 1
        %s214 = scalar_lea.sflag [#allocation4], %s213
        %s215 = sand.u32 %s137, 1
        %s216 = smul.addr %s215, 8
        %s217 = scalar_lea.vmem [#allocation3], %s216
        %p218 = scmp.lt.s32.totalorder %s19, 1
        %s219 = scalar_select %p218, %s19, 1
        %s220 = smul.addr %s219, 2
        %s221 = smul.addr %s220, 4
        %s222 = scalar_lea.vmem %s0, %s221
        %v223 = vld [vmem:[%s222] sm:$0xff]
        %v224 = vlaneseq
        %v225 = vand.u32 %v224, 127
        %v226 = vadd.s32 %v225, 128
        %vm227 = vcmp.lt.s32.totalorder %v225, 0
        %v228 = vsub.s32 0, %v225
        %v229 = vsel %vm227, %v228, %v225
        %v230 = vshrl.u32 %v229, 4
        %v231 = vand.u32 %v229, 15
        %v232 = vsub.s32 0, %v231
        %v233 = vsel %vm227, %v232, %v231
        %vm234 = vcmp.lt.s32.totalorder %v226, 0
        %v235 = vsub.s32 0, %v226
        %v236 = vsel %vm234, %v235, %v226
        %v237 = vshrl.u32 %v236, 4
        %v238 = vand.u32 %v236, 15
        %v239 = vsub.s32 0, %v238
        %v240 = vsel %vm234, %v239, %v238
        %vm241 = vcmp.ne.s32.totalorder %v233, 0
        %vm242 = vcmp.ne.s32.totalorder %v240, 0
        %vm243 = vcmp.lt.s32.totalorder %v233, 0
        %vm244 = vcmp.lt.s32.totalorder %v240, 0
        %vm245 = vmand %vm243, %vm241
        %vm246 = vmand %vm244, %vm242
        %v247 = vadd.s32 %v233, 16
        %v248 = vadd.s32 %v240, 16
        %v249 = vsel %vm245, %v247, %v233
        %v250 = vsel %vm246, %v248, %v240
        %vm251 = vcmp.ge.s32.totalorder %v249, 1
        %vm252 = vcmp.ge.s32.totalorder %v250, 1
        %vm253 = vcmp.le.s32.totalorder %v249, 14
        %vm254 = vcmp.le.s32.totalorder %v250, 14
        %255 = vst [vmem:[#allocation2] sm:$0xff] 0.0
        %256 = vst [vmem:[#allocation2 + $0x8] sm:$0xff] 0.0
        %vm257 = vcmp.ge.f32.partialorder %v223, 0.0
        %v258 = vmul.f32 %v223, 0.01
        %v259 = vsel %vm257, %v223, %v258
        %260 = vst [vmem:[#allocation2 + $0x4] sm:$0xff] %v259
        %v261 = vld [vmem:[#allocation2] sm:$0xff]
        %v262 = vld [vmem:[#allocation2 + $0x8] sm:$0xf]
        %v263 = vsel %vm251, 1, 0
        %v264 = vsel %vm252, 1, 0
        %vm265 = vcmp.eq.s32.totalorder %v263, 1
        %vm266 = vcmp.eq.s32.totalorder %v264, 1
        %269 = vst [vmem:[#allocation1] ss:$2 sm:$0xff] %v261
        %s270 = scalar_lea.vmem [#allocation1], 16
        %271 = vst [vmem:[%s270] ss:$2 sm:$0xff] %v262
        %v272 = vld.sshfl [vmem:[#allocation1] sm:$0xff pattern:$0x75316420]
        %v273 = vld.sshfl [vmem:[#allocation1 + $0x8] sm:$0xff pattern:$0x75316420]
        %v274 = vld.sshfl [vmem:[#allocation1 + $0x10] sm:$0xff pattern:$0x75316420]
        %275 = vrot.lane.b32.xlu0 %v272, 17
        %v276 = vpop.permute.xlu0 %275
        %277 = vrot.lane.b32.xlu0 %v273, 17
        %v278 = vpop.permute.xlu0 %277
        %279 = vrot.lane.b32.xlu0 %v274, 17
        %v280 = vpop.permute.xlu0 %279
        %vm281 = vcmask 138240
        %v282 = vsel %vm281, %v276, %v278
        %v283 = vsel %vm281, %v278, %v280
        %v286 = vsel %vm265, %v282, 0.0
        %v287 = vsel %vm266, %v283, 0.0
        %v288 = vld [vmem:[%s1] sm:$0xf]
        %v289 = vld [vmem:[#allocation2] sm:$0xff]
        %v290 = vld [vmem:[#allocation2 + $0x8] sm:$0xf]
        %s291 = scalar_lea.vmem %s1, 4
        %v292 = vld [vmem:[%s291] sm:$0xf]
        %295 = vst [vmem:[#allocation1] ss:$2 sm:$0xff] %v289
        %s296 = scalar_lea.vmem [#allocation1], 16
        %297 = vst [vmem:[%s296] ss:$2 sm:$0xff] %v290
        %v298 = vld.sshfl [vmem:[#allocation1] sm:$0xff pattern:$0x75316420]
        %v299 = vld.sshfl [vmem:[#allocation1 + $0x8] sm:$0xff pattern:$0x75316420]
        %v300 = vld.sshfl [vmem:[#allocation1 + $0x10] sm:$0xff pattern:$0x75316420]
        %301 = vrot.lane.b32.xlu0 %v298, 16
        %v302 = vpop.permute.xlu0 %301
        %303 = vrot.lane.b32.xlu0 %v299, 16
        %v304 = vpop.permute.xlu0 %303
        %305 = vrot.lane.b32.xlu0 %v300, 16
        %v306 = vpop.permute.xlu0 %305
        %vm307 = vcmask 130048
        %v308 = vsel %vm307, %v302, %v304
        %v309 = vsel %vm307, %v304, %v306
        %vm310 = vcmask 31744
        %v312 = vsel %vm310, %v292, 0
        %vm314 = vcmask 1043456
        %v315 = vsel %vm314, %v308, 0
        %v317 = vsel %vm314, %v309, 0
        %319 = vmatpush.msra.mxu0 0.0
        %320 = vmatpush.msra.mxu0 0.0
        %321 = vmatpush.msra.mxu0 0.0
        %322 = vmatpush.msra.mxu0 0.0
        %323 = vmatpush.msra.mxu0 0.0
        %324 = vmatpush.msra.mxu0 0.0
        %325 = vmatpush.msra.mxu0 0.0
        %326 = vmatpush.msra.mxu0 0.0
        %327 = vmatpush.msra.mxu0 0.0
        %328 = vmatpush.msra.mxu0 0.0
        %329 = vmatpush.msra.mxu0 0.0
        %330 = vmatpush.msra.mxu0 0.0
        %331 = vmatpush.msra.mxu0 0.0
        %332 = vmatpush.msra.mxu0 0.0
        %333 = vmatpush.msra.mxu0 0.0
        %334 = vmatpush.msra.mxu0 %v315
        %335 = vmatmul.f32.gmra.mxu0 %v312
        %v336 = vpop.f32.mrf.mxu0
        %v337 = vadd.f32 0.0, %v336
        %338 = vdwg.mxu0
        %339 = vmatpush.msra.mxu0 0.0
        %340 = vmatpush.msra.mxu0 0.0
        %341 = vmatpush.msra.mxu0 0.0
        %342 = vmatpush.msra.mxu0 0.0
        %343 = vmatpush.msra.mxu0 0.0
        %344 = vmatpush.msra.mxu0 0.0
        %345 = vmatpush.msra.mxu0 0.0
        %346 = vmatpush.msra.mxu0 0.0
        %347 = vmatpush.msra.mxu0 0.0
        %348 = vmatpush.msra.mxu0 0.0
        %349 = vmatpush.msra.mxu0 0.0
        %350 = vmatpush.msra.mxu0 0.0
        %351 = vmatpush.msra.mxu0 0.0
        %352 = vmatpush.msra.mxu0 0.0
        %353 = vmatpush.msra.mxu0 0.0
        %354 = vmatpush.msra.mxu0 %v317
        %355 = vmatmul.f32.gmra.mxu0 %v312
        %v356 = vpop.f32.mrf.mxu0
        %v357 = vadd.f32 0.0, %v356
        %358 = vdwg.mxu0
        %v360 = vsel %vm310, %v288, 0
        %v363 = vsel %vm314, %v286, 0
        %v366 = vsel %vm314, %v287, 0
        %368 = vmatpush.msra.mxu0 0.0
        %369 = vmatpush.msra.mxu0 0.0
        %370 = vmatpush.msra.mxu0 0.0
        %371 = vmatpush.msra.mxu0 0.0
        %372 = vmatpush.msra.mxu0 0.0
        %373 = vmatpush.msra.mxu0 0.0
        %374 = vmatpush.msra.mxu0 0.0
        %375 = vmatpush.msra.mxu0 0.0
        %376 = vmatpush.msra.mxu0 0.0
        %377 = vmatpush.msra.mxu0 0.0
        %378 = vmatpush.msra.mxu0 0.0
        %379 = vmatpush.msra.mxu0 0.0
        %380 = vmatpush.msra.mxu0 0.0
        %381 = vmatpush.msra.mxu0 0.0
        %382 = vmatpush.msra.mxu0 0.0
        %383 = vmatpush.msra.mxu0 %v363
        %384 = vmatmul.f32.gmra.mxu0 %v360
        %v385 = vpop.f32.mrf.mxu0
        %v386 = vadd.f32 %v337, %v385
        %387 = vdwg.mxu0
        %388 = vmatpush.msra.mxu0 0.0
        %389 = vmatpush.msra.mxu0 0.0
        %390 = vmatpush.msra.mxu0 0.0
        %391 = vmatpush.msra.mxu0 0.0
        %392 = vmatpush.msra.mxu0 0.0
        %393 = vmatpush.msra.mxu0 0.0
        %394 = vmatpush.msra.mxu0 0.0
        %395 = vmatpush.msra.mxu0 0.0
        %396 = vmatpush.msra.mxu0 0.0
        %397 = vmatpush.msra.mxu0 0.0
        %398 = vmatpush.msra.mxu0 0.0
        %399 = vmatpush.msra.mxu0 0.0
        %400 = vmatpush.msra.mxu0 0.0
        %401 = vmatpush.msra.mxu0 0.0
        %402 = vmatpush.msra.mxu0 0.0
        %403 = vmatpush.msra.mxu0 %v366
        %404 = vmatmul.f32.gmra.mxu0 %v360
        %v405 = vpop.f32.mrf.mxu0
        %v406 = vadd.f32 %v357, %v405
        %407 = vdwg.mxu0
        %v408 = vld [vmem:[#allocation2] sm:$0xff]
        %v409 = vld [vmem:[#allocation2 + $0x8] sm:$0xf]
        %v410 = vsel %vm253, 1, 0
        %v411 = vsel %vm254, 1, 0
        %vm412 = vcmp.eq.s32.totalorder %v410, 1
        %vm413 = vcmp.eq.s32.totalorder %v411, 1
        %416 = vst [vmem:[#allocation1] ss:$2 sm:$0xff] %v408
        %s417 = scalar_lea.vmem [#allocation1], 16
        %418 = vst [vmem:[%s417] ss:$2 sm:$0xff] %v409
        %v419 = vld.sshfl [vmem:[#allocation1] sm:$0xff pattern:$0x75316420]
        %v420 = vld.sshfl [vmem:[#allocation1 + $0x8] sm:$0xff pattern:$0x75316420]
        %v421 = vld.sshfl [vmem:[#allocation1 + $0x10] sm:$0xff pattern:$0x75316420]
        %422 = vrot.lane.b32.xlu0 %v419, 15
        %v423 = vpop.permute.xlu0 %422
        %424 = vrot.lane.b32.xlu0 %v420, 15
        %v425 = vpop.permute.xlu0 %424
        %426 = vrot.lane.b32.xlu0 %v421, 15
        %v427 = vpop.permute.xlu0 %426
        %vm428 = vcmask 121856
        %v429 = vsel %vm428, %v423, %v425
        %v430 = vsel %vm428, %v425, %v427
        %v433 = vsel %vm412, %v429, 0.0
        %v434 = vsel %vm413, %v430, 0.0
        %s435 = scalar_lea.vmem %s1, 8
        %v436 = vld [vmem:[%s435] sm:$0xf]
        %v438 = vsel %vm310, %v436, 0
        %v441 = vsel %vm314, %v433, 0
        %v444 = vsel %vm314, %v434, 0
        %446 = vmatpush.msra.mxu0 0.0
        %447 = vmatpush.msra.mxu0 0.0
        %448 = vmatpush.msra.mxu0 0.0
        %449 = vmatpush.msra.mxu0 0.0
        %450 = vmatpush.msra.mxu0 0.0
        %451 = vmatpush.msra.mxu0 0.0
        %452 = vmatpush.msra.mxu0 0.0
        %453 = vmatpush.msra.mxu0 0.0
        %454 = vmatpush.msra.mxu0 0.0
        %455 = vmatpush.msra.mxu0 0.0
        %456 = vmatpush.msra.mxu0 0.0
        %457 = vmatpush.msra.mxu0 0.0
        %458 = vmatpush.msra.mxu0 0.0
        %459 = vmatpush.msra.mxu0 0.0
        %460 = vmatpush.msra.mxu0 0.0
        %461 = vmatpush.msra.mxu0 %v441
        %462 = vmatmul.f32.gmra.mxu0 %v438
        %v463 = vpop.f32.mrf.mxu0
        %v464 = vadd.f32 0.0, %v463
        %465 = vdwg.mxu0
        %466 = vmatpush.msra.mxu0 0.0
        %467 = vmatpush.msra.mxu0 0.0
        %468 = vmatpush.msra.mxu0 0.0
        %469 = vmatpush.msra.mxu0 0.0
        %470 = vmatpush.msra.mxu0 0.0
        %471 = vmatpush.msra.mxu0 0.0
        %472 = vmatpush.msra.mxu0 0.0
        %473 = vmatpush.msra.mxu0 0.0
        %474 = vmatpush.msra.mxu0 0.0
        %475 = vmatpush.msra.mxu0 0.0
        %476 = vmatpush.msra.mxu0 0.0
        %477 = vmatpush.msra.mxu0 0.0
        %478 = vmatpush.msra.mxu0 0.0
        %479 = vmatpush.msra.mxu0 0.0
        %480 = vmatpush.msra.mxu0 0.0
        %481 = vmatpush.msra.mxu0 %v444
        %482 = vmatmul.f32.gmra.mxu0 %v438
        %v483 = vpop.f32.mrf.mxu0
        %v484 = vadd.f32 0.0, %v483
        %485 = vdwg.mxu0
        %v486 = vadd.f32 %v386, %v464
        %v487 = vadd.f32 %v406, %v484
        %v488 = vld [vmem:[#allocation2] sm:$0xff]
        %v489 = vld [vmem:[#allocation2 + $0x8] sm:$0xf]
        %492 = vst [vmem:[#allocation1] ss:$2 sm:$0xff] %v488
        %s493 = scalar_lea.vmem [#allocation1], 16
        %494 = vst [vmem:[%s493] ss:$2 sm:$0xff] %v489
        %v495 = vld.sshfl [vmem:[#allocation1] sm:$0xff pattern:$0x75316420]
        %v496 = vld.sshfl [vmem:[#allocation1 + $0x8] sm:$0xff pattern:$0x75316420]
        %v497 = vld.sshfl [vmem:[#allocation1 + $0x10] sm:$0xff pattern:$0x75316420]
        %498 = vrot.lane.b32.xlu0 %v495, 1
        %v499 = vpop.permute.xlu0 %498
        %500 = vrot.lane.b32.xlu0 %v496, 1
        %v501 = vpop.permute.xlu0 %500
        %502 = vrot.lane.b32.xlu0 %v497, 1
        %v503 = vpop.permute.xlu0 %502
        %vm504 = vcmask 7168
        %v505 = vsel %vm504, %v499, %v501
        %v506 = vsel %vm504, %v501, %v503
        %v509 = vsel %vm265, %v505, 0.0
        %v510 = vsel %vm266, %v506, 0.0
        %s511 = scalar_lea.vmem %s1, 12
        %v512 = vld [vmem:[%s511] sm:$0xf]
        %v514 = vsel %vm310, %v512, 0
        %v517 = vsel %vm314, %v509, 0
        %v520 = vsel %vm314, %v510, 0
        %522 = vmatpush.msra.mxu0 0.0
        %523 = vmatpush.msra.mxu0 0.0
        %524 = vmatpush.msra.mxu0 0.0
        %525 = vmatpush.msra.mxu0 0.0
        %526 = vmatpush.msra.mxu0 0.0
        %527 = vmatpush.msra.mxu0 0.0
        %528 = vmatpush.msra.mxu0 0.0
        %529 = vmatpush.msra.mxu0 0.0
        %530 = vmatpush.msra.mxu0 0.0
        %531 = vmatpush.msra.mxu0 0.0
        %532 = vmatpush.msra.mxu0 0.0
        %533 = vmatpush.msra.mxu0 0.0
        %534 = vmatpush.msra.mxu0 0.0
        %535 = vmatpush.msra.mxu0 0.0
        %536 = vmatpush.msra.mxu0 0.0
        %537 = vmatpush.msra.mxu0 %v517
        %538 = vmatmul.f32.gmra.mxu0 %v514
        %v539 = vpop.f32.mrf.mxu0
        %v540 = vadd.f32 0.0, %v539
        %541 = vdwg.mxu0
        %542 = vmatpush.msra.mxu0 0.0
        %543 = vmatpush.msra.mxu0 0.0
        %544 = vmatpush.msra.mxu0 0.0
        %545 = vmatpush.msra.mxu0 0.0
        %546 = vmatpush.msra.mxu0 0.0
        %547 = vmatpush.msra.mxu0 0.0
        %548 = vmatpush.msra.mxu0 0.0
        %549 = vmatpush.msra.mxu0 0.0
        %550 = vmatpush.msra.mxu0 0.0
        %551 = vmatpush.msra.mxu0 0.0
        %552 = vmatpush.msra.mxu0 0.0
        %553 = vmatpush.msra.mxu0 0.0
        %554 = vmatpush.msra.mxu0 0.0
        %555 = vmatpush.msra.mxu0 0.0
        %556 = vmatpush.msra.mxu0 0.0
        %557 = vmatpush.msra.mxu0 %v520
        %558 = vmatmul.f32.gmra.mxu0 %v514
        %v559 = vpop.f32.mrf.mxu0
        %v560 = vadd.f32 0.0, %v559
        %561 = vdwg.mxu0
        %v562 = vadd.f32 %v486, %v540
        %v563 = vadd.f32 %v487, %v560
        %v564 = vld [vmem:[#allocation2 + $0x4] sm:$0xff]
        %s565 = scalar_lea.vmem %s1, 16
        %v566 = vld [vmem:[%s565] sm:$0xf]
        %568 = vst [vmem:[#allocation1] ss:$2 sm:$0xff] %v564
        %v569 = vld.sshfl [vmem:[#allocation1] sm:$0xff pattern:$0x75316420]
        %v570 = vld.sshfl [vmem:[#allocation1 + $0x8] sm:$0xff pattern:$0x75316420]
        %v572 = vsel %vm310, %v566, 0
        %v574 = vsel %vm314, %v569, 0
        %v576 = vsel %vm314, %v570, 0
        %578 = vmatpush.msra.mxu0 0.0
        %579 = vmatpush.msra.mxu0 0.0
        %580 = vmatpush.msra.mxu0 0.0
        %581 = vmatpush.msra.mxu0 0.0
        %582 = vmatpush.msra.mxu0 0.0
        %583 = vmatpush.msra.mxu0 0.0
        %584 = vmatpush.msra.mxu0 0.0
        %585 = vmatpush.msra.mxu0 0.0
        %586 = vmatpush.msra.mxu0 0.0
        %587 = vmatpush.msra.mxu0 0.0
        %588 = vmatpush.msra.mxu0 0.0
        %589 = vmatpush.msra.mxu0 0.0
        %590 = vmatpush.msra.mxu0 0.0
        %591 = vmatpush.msra.mxu0 0.0
        %592 = vmatpush.msra.mxu0 0.0
        %593 = vmatpush.msra.mxu0 %v574
        %594 = vmatmul.f32.gmra.mxu0 %v572
        %v595 = vpop.f32.mrf.mxu0
        %v596 = vadd.f32 0.0, %v595
        %597 = vdwg.mxu0
        %598 = vmatpush.msra.mxu0 0.0
        %599 = vmatpush.msra.mxu0 0.0
        %600 = vmatpush.msra.mxu0 0.0
        %601 = vmatpush.msra.mxu0 0.0
        %602 = vmatpush.msra.mxu0 0.0
        %603 = vmatpush.msra.mxu0 0.0
        %604 = vmatpush.msra.mxu0 0.0
        %605 = vmatpush.msra.mxu0 0.0
        %606 = vmatpush.msra.mxu0 0.0
        %607 = vmatpush.msra.mxu0 0.0
        %608 = vmatpush.msra.mxu0 0.0
        %609 = vmatpush.msra.mxu0 0.0
        %610 = vmatpush.msra.mxu0 0.0
        %611 = vmatpush.msra.mxu0 0.0
        %612 = vmatpush.msra.mxu0 0.0
        %613 = vmatpush.msra.mxu0 %v576
        %614 = vmatmul.f32.gmra.mxu0 %v572
        %v615 = vpop.f32.mrf.mxu0
        %v616 = vadd.f32 0.0, %v615
        %617 = vdwg.mxu0
        %v618 = vadd.f32 %v562, %v596
        %v619 = vadd.f32 %v563, %v616
        %v620 = vld [vmem:[#allocation2 + $0x4] sm:$0xff]
        %v621 = vld [vmem:[#allocation2 + $0xc] sm:$0xf]
        %624 = vst [vmem:[#allocation1] ss:$2 sm:$0xff] %v620
        %s625 = scalar_lea.vmem [#allocation1], 16
        %626 = vst [vmem:[%s625] ss:$2 sm:$0xff] %v621
        %v627 = vld.sshfl [vmem:[#allocation1] sm:$0xff pattern:$0x75316420]
        %v628 = vld.sshfl [vmem:[#allocation1 + $0x8] sm:$0xff pattern:$0x75316420]
        %v629 = vld.sshfl [vmem:[#allocation1 + $0x10] sm:$0xff pattern:$0x75316420]
        %630 = vrot.lane.b32.xlu0 %v627, 127
        %v631 = vpop.permute.xlu0 %630
        %632 = vrot.lane.b32.xlu0 %v628, 127
        %v633 = vpop.permute.xlu0 %632
        %634 = vrot.lane.b32.xlu0 %v629, 127
        %v635 = vpop.permute.xlu0 %634
        %vm636 = vcmask 1039360
        %v637 = vsel %vm636, %v631, %v633
        %v638 = vsel %vm636, %v633, %v635
        %v641 = vsel %vm412, %v637, 0.0
        %v642 = vsel %vm413, %v638, 0.0
        %s643 = scalar_lea.vmem %s1, 20
        %v644 = vld [vmem:[%s643] sm:$0xf]
        %v646 = vsel %vm310, %v644, 0
        %v649 = vsel %vm314, %v641, 0
        %v652 = vsel %vm314, %v642, 0
        %654 = vmatpush.msra.mxu0 0.0
        %655 = vmatpush.msra.mxu0 0.0
        %656 = vmatpush.msra.mxu0 0.0
        %657 = vmatpush.msra.mxu0 0.0
        %658 = vmatpush.msra.mxu0 0.0
        %659 = vmatpush.msra.mxu0 0.0
        %660 = vmatpush.msra.mxu0 0.0
        %661 = vmatpush.msra.mxu0 0.0
        %662 = vmatpush.msra.mxu0 0.0
        %663 = vmatpush.msra.mxu0 0.0
        %664 = vmatpush.msra.mxu0 0.0
        %665 = vmatpush.msra.mxu0 0.0
        %666 = vmatpush.msra.mxu0 0.0
        %667 = vmatpush.msra.mxu0 0.0
        %668 = vmatpush.msra.mxu0 0.0
        %669 = vmatpush.msra.mxu0 %v649
        %670 = vmatmul.f32.gmra.mxu0 %v646
        %v671 = vpop.f32.mrf.mxu0
        %v672 = vadd.f32 0.0, %v671
        %673 = vdwg.mxu0
        %674 = vmatpush.msra.mxu0 0.0
        %675 = vmatpush.msra.mxu0 0.0
        %676 = vmatpush.msra.mxu0 0.0
        %677 = vmatpush.msra.mxu0 0.0
        %678 = vmatpush.msra.mxu0 0.0
        %679 = vmatpush.msra.mxu0 0.0
        %680 = vmatpush.msra.mxu0 0.0
        %681 = vmatpush.msra.mxu0 0.0
        %682 = vmatpush.msra.mxu0 0.0
        %683 = vmatpush.msra.mxu0 0.0
        %684 = vmatpush.msra.mxu0 0.0
        %685 = vmatpush.msra.mxu0 0.0
        %686 = vmatpush.msra.mxu0 0.0
        %687 = vmatpush.msra.mxu0 0.0
        %688 = vmatpush.msra.mxu0 0.0
        %689 = vmatpush.msra.mxu0 %v652
        %690 = vmatmul.f32.gmra.mxu0 %v646
        %v691 = vpop.f32.mrf.mxu0
        %v692 = vadd.f32 0.0, %v691
        %693 = vdwg.mxu0
        %v694 = vadd.f32 %v618, %v672
        %v695 = vadd.f32 %v619, %v692
        %v696 = vld [vmem:[#allocation2 + $0x4] sm:$0xff]
        %v697 = vld [vmem:[#allocation2 + $0xc] sm:$0xf]
        %700 = vst [vmem:[#allocation1] ss:$2 sm:$0xff] %v696
        %s701 = scalar_lea.vmem [#allocation1], 16
        %702 = vst [vmem:[%s701] ss:$2 sm:$0xff] %v697
        %v703 = vld.sshfl [vmem:[#allocation1] sm:$0xff pattern:$0x75316420]
        %v704 = vld.sshfl [vmem:[#allocation1 + $0x8] sm:$0xff pattern:$0x75316420]
        %v705 = vld.sshfl [vmem:[#allocation1 + $0x10] sm:$0xff pattern:$0x75316420]
        %706 = vrot.lane.b32.xlu0 %v703, 113
        %v707 = vpop.permute.xlu0 %706
        %708 = vrot.lane.b32.xlu0 %v704, 113
        %v709 = vpop.permute.xlu0 %708
        %710 = vrot.lane.b32.xlu0 %v705, 113
        %v711 = vpop.permute.xlu0 %710
        %vm712 = vcmask 924672
        %v713 = vsel %vm712, %v707, %v709
        %v714 = vsel %vm712, %v709, %v711
        %v717 = vsel %vm265, %v713, 0.0
        %v718 = vsel %vm266, %v714, 0.0
        %s719 = scalar_lea.vmem %s1, 24
        %v720 = vld [vmem:[%s719] sm:$0xf]
        %v722 = vsel %vm310, %v720, 0
        %v725 = vsel %vm314, %v717, 0
        %v728 = vsel %vm314, %v718, 0
        %730 = vmatpush.msra.mxu0 0.0
        %731 = vmatpush.msra.mxu0 0.0
        %732 = vmatpush.msra.mxu0 0.0
        %733 = vmatpush.msra.mxu0 0.0
        %734 = vmatpush.msra.mxu0 0.0
        %735 = vmatpush.msra.mxu0 0.0
        %736 = vmatpush.msra.mxu0 0.0
        %737 = vmatpush.msra.mxu0 0.0
        %738 = vmatpush.msra.mxu0 0.0
        %739 = vmatpush.msra.mxu0 0.0
        %740 = vmatpush.msra.mxu0 0.0
        %741 = vmatpush.msra.mxu0 0.0
        %742 = vmatpush.msra.mxu0 0.0
        %743 = vmatpush.msra.mxu0 0.0
        %744 = vmatpush.msra.mxu0 0.0
        %745 = vmatpush.msra.mxu0 %v725
        %746 = vmatmul.f32.gmra.mxu0 %v722
        %v747 = vpop.f32.mrf.mxu0
        %v748 = vadd.f32 0.0, %v747
        %749 = vdwg.mxu0
        %750 = vmatpush.msra.mxu0 0.0
        %751 = vmatpush.msra.mxu0 0.0
        %752 = vmatpush.msra.mxu0 0.0
        %753 = vmatpush.msra.mxu0 0.0
        %754 = vmatpush.msra.mxu0 0.0
        %755 = vmatpush.msra.mxu0 0.0
        %756 = vmatpush.msra.mxu0 0.0
        %757 = vmatpush.msra.mxu0 0.0
        %758 = vmatpush.msra.mxu0 0.0
        %759 = vmatpush.msra.mxu0 0.0
        %760 = vmatpush.msra.mxu0 0.0
        %761 = vmatpush.msra.mxu0 0.0
        %762 = vmatpush.msra.mxu0 0.0
        %763 = vmatpush.msra.mxu0 0.0
        %764 = vmatpush.msra.mxu0 0.0
        %765 = vmatpush.msra.mxu0 %v728
        %766 = vmatmul.f32.gmra.mxu0 %v722
        %v767 = vpop.f32.mrf.mxu0
        %v768 = vadd.f32 0.0, %v767
        %769 = vdwg.mxu0
        %v770 = vadd.f32 %v694, %v748
        %v771 = vadd.f32 %v695, %v768
        %v772 = vld [vmem:[#allocation2 + $0x4] sm:$0xff]
        %v773 = vld [vmem:[#allocation2 + $0xc] sm:$0xf]
        %s774 = scalar_lea.vmem %s1, 28
        %v775 = vld [vmem:[%s774] sm:$0xf]
        %778 = vst [vmem:[#allocation1] ss:$2 sm:$0xff] %v772
        %s779 = scalar_lea.vmem [#allocation1], 16
        %780 = vst [vmem:[%s779] ss:$2 sm:$0xff] %v773
        %v781 = vld.sshfl [vmem:[#allocation1] sm:$0xff pattern:$0x75316420]
        %v782 = vld.sshfl [vmem:[#allocation1 + $0x8] sm:$0xff pattern:$0x75316420]
        %v783 = vld.sshfl [vmem:[#allocation1 + $0x10] sm:$0xff pattern:$0x75316420]
        %784 = vrot.lane.b32.xlu0 %v781, 112
        %v785 = vpop.permute.xlu0 %784
        %786 = vrot.lane.b32.xlu0 %v782, 112
        %v787 = vpop.permute.xlu0 %786
        %788 = vrot.lane.b32.xlu0 %v783, 112
        %v789 = vpop.permute.xlu0 %788
        %vm790 = vcmask 916480
        %v791 = vsel %vm790, %v785, %v787
        %v792 = vsel %vm790, %v787, %v789
        %v794 = vsel %vm310, %v775, 0
        %v796 = vsel %vm314, %v791, 0
        %v798 = vsel %vm314, %v792, 0
        %800 = vmatpush.msra.mxu0 0.0
        %801 = vmatpush.msra.mxu0 0.0
        %802 = vmatpush.msra.mxu0 0.0
        %803 = vmatpush.msra.mxu0 0.0
        %804 = vmatpush.msra.mxu0 0.0
        %805 = vmatpush.msra.mxu0 0.0
        %806 = vmatpush.msra.mxu0 0.0
        %807 = vmatpush.msra.mxu0 0.0
        %808 = vmatpush.msra.mxu0 0.0
        %809 = vmatpush.msra.mxu0 0.0
        %810 = vmatpush.msra.mxu0 0.0
        %811 = vmatpush.msra.mxu0 0.0
        %812 = vmatpush.msra.mxu0 0.0
        %813 = vmatpush.msra.mxu0 0.0
        %814 = vmatpush.msra.mxu0 0.0
        %815 = vmatpush.msra.mxu0 %v796
        %816 = vmatmul.f32.gmra.mxu0 %v794
        %v817 = vpop.f32.mrf.mxu0
        %v818 = vadd.f32 0.0, %v817
        %819 = vdwg.mxu0
        %820 = vmatpush.msra.mxu0 0.0
        %821 = vmatpush.msra.mxu0 0.0
        %822 = vmatpush.msra.mxu0 0.0
        %823 = vmatpush.msra.mxu0 0.0
        %824 = vmatpush.msra.mxu0 0.0
        %825 = vmatpush.msra.mxu0 0.0
        %826 = vmatpush.msra.mxu0 0.0
        %827 = vmatpush.msra.mxu0 0.0
        %828 = vmatpush.msra.mxu0 0.0
        %829 = vmatpush.msra.mxu0 0.0
        %830 = vmatpush.msra.mxu0 0.0
        %831 = vmatpush.msra.mxu0 0.0
        %832 = vmatpush.msra.mxu0 0.0
        %833 = vmatpush.msra.mxu0 0.0
        %834 = vmatpush.msra.mxu0 0.0
        %835 = vmatpush.msra.mxu0 %v798
        %836 = vmatmul.f32.gmra.mxu0 %v794
        %v837 = vpop.f32.mrf.mxu0
        %v838 = vadd.f32 0.0, %v837
        %839 = vdwg.mxu0
        %v840 = vadd.f32 %v770, %v818
        %v841 = vadd.f32 %v771, %v838
        %v842 = vld [vmem:[#allocation2 + $0x4] sm:$0xff]
        %v843 = vld [vmem:[#allocation2 + $0xc] sm:$0xf]
        %846 = vst [vmem:[#allocation1] ss:$2 sm:$0xff] %v842
        %s847 = scalar_lea.vmem [#allocation1], 16
        %848 = vst [vmem:[%s847] ss:$2 sm:$0xff] %v843
        %v849 = vld.sshfl [vmem:[#allocation1] sm:$0xff pattern:$0x75316420]
        %v850 = vld.sshfl [vmem:[#allocation1 + $0x8] sm:$0xff pattern:$0x75316420]
        %v851 = vld.sshfl [vmem:[#allocation1 + $0x10] sm:$0xff pattern:$0x75316420]
        %852 = vrot.lane.b32.xlu0 %v849, 111
        %v853 = vpop.permute.xlu0 %852
        %854 = vrot.lane.b32.xlu0 %v850, 111
        %v855 = vpop.permute.xlu0 %854
        %856 = vrot.lane.b32.xlu0 %v851, 111
        %v857 = vpop.permute.xlu0 %856
        %vm858 = vcmask 908288
        %v859 = vsel %vm858, %v853, %v855
        %v860 = vsel %vm858, %v855, %v857
        %v863 = vsel %vm412, %v859, 0.0
        %v864 = vsel %vm413, %v860, 0.0
        %s865 = scalar_lea.vmem %s1, 32
        %v866 = vld [vmem:[%s865] sm:$0xf]
        %v868 = vsel %vm310, %v866, 0
        %v871 = vsel %vm314, %v863, 0
        %v874 = vsel %vm314, %v864, 0
        %876 = vmatpush.msra.mxu0 0.0
        %877 = vmatpush.msra.mxu0 0.0
        %878 = vmatpush.msra.mxu0 0.0
        %879 = vmatpush.msra.mxu0 0.0
        %880 = vmatpush.msra.mxu0 0.0
        %881 = vmatpush.msra.mxu0 0.0
        %882 = vmatpush.msra.mxu0 0.0
        %883 = vmatpush.msra.mxu0 0.0
        %884 = vmatpush.msra.mxu0 0.0
        %885 = vmatpush.msra.mxu0 0.0
        %886 = vmatpush.msra.mxu0 0.0
        %887 = vmatpush.msra.mxu0 0.0
        %888 = vmatpush.msra.mxu0 0.0
        %889 = vmatpush.msra.mxu0 0.0
        %890 = vmatpush.msra.mxu0 0.0
        %891 = vmatpush.msra.mxu0 %v871
        %892 = vmatmul.f32.gmra.mxu0 %v868
        %v893 = vpop.f32.mrf.mxu0
        %v894 = vadd.f32 0.0, %v893
        %895 = vdwg.mxu0
        %896 = vmatpush.msra.mxu0 0.0
        %897 = vmatpush.msra.mxu0 0.0
        %898 = vmatpush.msra.mxu0 0.0
        %899 = vmatpush.msra.mxu0 0.0
        %900 = vmatpush.msra.mxu0 0.0
        %901 = vmatpush.msra.mxu0 0.0
        %902 = vmatpush.msra.mxu0 0.0
        %903 = vmatpush.msra.mxu0 0.0
        %904 = vmatpush.msra.mxu0 0.0
        %905 = vmatpush.msra.mxu0 0.0
        %906 = vmatpush.msra.mxu0 0.0
        %907 = vmatpush.msra.mxu0 0.0
        %908 = vmatpush.msra.mxu0 0.0
        %909 = vmatpush.msra.mxu0 0.0
        %910 = vmatpush.msra.mxu0 0.0
        %911 = vmatpush.msra.mxu0 %v874
        %912 = vmatmul.f32.gmra.mxu0 %v868
        %v913 = vpop.f32.mrf.mxu0
        %v914 = vadd.f32 0.0, %v913
        %915 = vdwg.mxu0
        %v916 = vadd.f32 %v840, %v894
        %v917 = vadd.f32 %v841, %v914
        %v918 = vld [vmem:[%s2] sm:$0xf]
        %920 = vset.pattern.permute.xlu0 0
        %921 = vperm.xlu0 %920, %v918
        %v922 = vpop.permute.xlu0 %921
        %v924 = vadd.f32 %v916, %v922
        %v925 = vadd.f32 %v917, %v922
        %vm926 = vcmp.ge.f32.partialorder %v924, 0.0
        %vm927 = vcmp.ge.f32.partialorder %v925, 0.0
        %v928 = vmul.f32 %v924, 0.01
        %v929 = vmul.f32 %v925, 0.01
        %v930 = vsel %vm926, %v924, %v928
        %v931 = vsel %vm927, %v925, %v929
        %v934 = vrot.slane %v931, 4
        %v935 = vsel %vm314, %v930, %v934
        %937 = vst [vmem:[#allocation2 + $0x4] sm:$0xff] %v935
        %v938 = vld [vmem:[#allocation2] sm:$0xff]
        %v939 = vld [vmem:[#allocation2 + $0x8] sm:$0xf]
        %942 = vst [vmem:[#allocation1] ss:$2 sm:$0xff] %v938
        %s943 = scalar_lea.vmem [#allocation1], 16
        %944 = vst [vmem:[%s943] ss:$2 sm:$0xff] %v939
        %v945 = vld.sshfl [vmem:[#allocation1] sm:$0xff pattern:$0x75316420]
        %v946 = vld.sshfl [vmem:[#allocation1 + $0x8] sm:$0xff pattern:$0x75316420]
        %v947 = vld.sshfl [vmem:[#allocation1 + $0x10] sm:$0xff pattern:$0x75316420]
        %948 = vrot.lane.b32.xlu0 %v945, 17
        %v949 = vpop.permute.xlu0 %948
        %950 = vrot.lane.b32.xlu0 %v946, 17
        %v951 = vpop.permute.xlu0 %950
        %952 = vrot.lane.b32.xlu0 %v947, 17
        %v953 = vpop.permute.xlu0 %952
        %v954 = vsel %vm281, %v949, %v951
        %v955 = vsel %vm281, %v951, %v953
        %v958 = vsel %vm265, %v954, 0.0
        %v959 = vsel %vm266, %v955, 0.0
        %v960 = vld [vmem:[%s3] sm:$0xf]
        %v961 = vld [vmem:[#allocation2] sm:$0xff]
        %v962 = vld [vmem:[#allocation2 + $0x8] sm:$0xf]
        %s963 = scalar_lea.vmem %s3, 4
        %v964 = vld [vmem:[%s963] sm:$0xf]
        %967 = vst [vmem:[#allocation1] ss:$2 sm:$0xff] %v961
        %s968 = scalar_lea.vmem [#allocation1], 16
        %969 = vst [vmem:[%s968] ss:$2 sm:$0xff] %v962
        %v970 = vld.sshfl [vmem:[#allocation1] sm:$0xff pattern:$0x75316420]
        %v971 = vld.sshfl [vmem:[#allocation1 + $0x8] sm:$0xff pattern:$0x75316420]
        %v972 = vld.sshfl [vmem:[#allocation1 + $0x10] sm:$0xff pattern:$0x75316420]
        %973 = vrot.lane.b32.xlu0 %v970, 16
        %v974 = vpop.permute.xlu0 %973
        %975 = vrot.lane.b32.xlu0 %v971, 16
        %v976 = vpop.permute.xlu0 %975
        %977 = vrot.lane.b32.xlu0 %v972, 16
        %v978 = vpop.permute.xlu0 %977
        %v979 = vsel %vm307, %v974, %v976
        %v980 = vsel %vm307, %v976, %v978
        %v982 = vsel %vm310, %v964, 0
        %v984 = vsel %vm314, %v979, 0
        %v986 = vsel %vm314, %v980, 0
        %988 = vmatpush.msra.mxu0 0.0
        %989 = vmatpush.msra.mxu0 0.0
        %990 = vmatpush.msra.mxu0 0.0
        %991 = vmatpush.msra.mxu0 0.0
        %992 = vmatpush.msra.mxu0 0.0
        %993 = vmatpush.msra.mxu0 0.0
        %994 = vmatpush.msra.mxu0 0.0
        %995 = vmatpush.msra.mxu0 0.0
        %996 = vmatpush.msra.mxu0 0.0
        %997 = vmatpush.msra.mxu0 0.0
        %998 = vmatpush.msra.mxu0 0.0
        %999 = vmatpush.msra.mxu0 0.0
        %1000 = vmatpush.msra.mxu0 0.0
        %1001 = vmatpush.msra.mxu0 0.0
        %1002 = vmatpush.msra.mxu0 0.0
        %1003 = vmatpush.msra.mxu0 %v984
        %1004 = vmatmul.f32.gmra.mxu0 %v982
        %v1005 = vpop.f32.mrf.mxu0
        %v1006 = vadd.f32 0.0, %v1005
        %1007 = vdwg.mxu0
        %1008 = vmatpush.msra.mxu0 0.0
        %1009 = vmatpush.msra.mxu0 0.0
        %1010 = vmatpush.msra.mxu0 0.0
        %1011 = vmatpush.msra.mxu0 0.0
        %1012 = vmatpush.msra.mxu0 0.0
        %1013 = vmatpush.msra.mxu0 0.0
        %1014 = vmatpush.msra.mxu0 0.0
        %1015 = vmatpush.msra.mxu0 0.0
        %1016 = vmatpush.msra.mxu0 0.0
        %1017 = vmatpush.msra.mxu0 0.0
        %1018 = vmatpush.msra.mxu0 0.0
        %1019 = vmatpush.msra.mxu0 0.0
        %1020 = vmatpush.msra.mxu0 0.0
        %1021 = vmatpush.msra.mxu0 0.0
        %1022 = vmatpush.msra.mxu0 0.0
        %1023 = vmatpush.msra.mxu0 %v986
        %1024 = vmatmul.f32.gmra.mxu0 %v982
        %v1025 = vpop.f32.mrf.mxu0
        %v1026 = vadd.f32 0.0, %v1025
        %1027 = vdwg.mxu0
        %v1029 = vsel %vm310, %v960, 0
        %v1032 = vsel %vm314, %v958, 0
        %v1035 = vsel %vm314, %v959, 0
        %1037 = vmatpush.msra.mxu0 0.0
        %1038 = vmatpush.msra.mxu0 0.0
        %1039 = vmatpush.msra.mxu0 0.0
        %1040 = vmatpush.msra.mxu0 0.0
        %1041 = vmatpush.msra.mxu0 0.0
        %1042 = vmatpush.msra.mxu0 0.0
        %1043 = vmatpush.msra.mxu0 0.0
        %1044 = vmatpush.msra.mxu0 0.0
        %1045 = vmatpush.msra.mxu0 0.0
        %1046 = vmatpush.msra.mxu0 0.0
        %1047 = vmatpush.msra.mxu0 0.0
        %1048 = vmatpush.msra.mxu0 0.0
        %1049 = vmatpush.msra.mxu0 0.0
        %1050 = vmatpush.msra.mxu0 0.0
        %1051 = vmatpush.msra.mxu0 0.0
        %1052 = vmatpush.msra.mxu0 %v1032
        %1053 = vmatmul.f32.gmra.mxu0 %v1029
        %v1054 = vpop.f32.mrf.mxu0
        %v1055 = vadd.f32 %v1006, %v1054
        %1056 = vdwg.mxu0
        %1057 = vmatpush.msra.mxu0 0.0
        %1058 = vmatpush.msra.mxu0 0.0
        %1059 = vmatpush.msra.mxu0 0.0
        %1060 = vmatpush.msra.mxu0 0.0
        %1061 = vmatpush.msra.mxu0 0.0
        %1062 = vmatpush.msra.mxu0 0.0
        %1063 = vmatpush.msra.mxu0 0.0
        %1064 = vmatpush.msra.mxu0 0.0
        %1065 = vmatpush.msra.mxu0 0.0
        %1066 = vmatpush.msra.mxu0 0.0
        %1067 = vmatpush.msra.mxu0 0.0
        %1068 = vmatpush.msra.mxu0 0.0
        %1069 = vmatpush.msra.mxu0 0.0
        %1070 = vmatpush.msra.mxu0 0.0
        %1071 = vmatpush.msra.mxu0 0.0
        %1072 = vmatpush.msra.mxu0 %v1035
        %1073 = vmatmul.f32.gmra.mxu0 %v1029
        %v1074 = vpop.f32.mrf.mxu0
        %v1075 = vadd.f32 %v1026, %v1074
        %1076 = vdwg.mxu0
        %v1077 = vld [vmem:[#allocation2] sm:$0xff]
        %v1078 = vld [vmem:[#allocation2 + $0x8] sm:$0xf]
        %1081 = vst [vmem:[#allocation1] ss:$2 sm:$0xff] %v1077
        %s1082 = scalar_lea.vmem [#allocation1], 16
        %1083 = vst [vmem:[%s1082] ss:$2 sm:$0xff] %v1078
        %v1084 = vld.sshfl [vmem:[#allocation1] sm:$0xff pattern:$0x75316420]
        %v1085 = vld.sshfl [vmem:[#allocation1 + $0x8] sm:$0xff pattern:$0x75316420]
        %v1086 = vld.sshfl [vmem:[#allocation1 + $0x10] sm:$0xff pattern:$0x75316420]
        %1087 = vrot.lane.b32.xlu0 %v1084, 15
        %v1088 = vpop.permute.xlu0 %1087
        %1089 = vrot.lane.b32.xlu0 %v1085, 15
        %v1090 = vpop.permute.xlu0 %1089
        %1091 = vrot.lane.b32.xlu0 %v1086, 15
        %v1092 = vpop.permute.xlu0 %1091
        %v1093 = vsel %vm428, %v1088, %v1090
        %v1094 = vsel %vm428, %v1090, %v1092
        %v1097 = vsel %vm412, %v1093, 0.0
        %v1098 = vsel %vm413, %v1094, 0.0
        %s1099 = scalar_lea.vmem %s3, 8
        %v1100 = vld [vmem:[%s1099] sm:$0xf]
        %v1102 = vsel %vm310, %v1100, 0
        %v1105 = vsel %vm314, %v1097, 0
        %v1108 = vsel %vm314, %v1098, 0
        %1110 = vmatpush.msra.mxu0 0.0
        %1111 = vmatpush.msra.mxu0 0.0
        %1112 = vmatpush.msra.mxu0 0.0
        %1113 = vmatpush.msra.mxu0 0.0
        %1114 = vmatpush.msra.mxu0 0.0
        %1115 = vmatpush.msra.mxu0 0.0
        %1116 = vmatpush.msra.mxu0 0.0
        %1117 = vmatpush.msra.mxu0 0.0
        %1118 = vmatpush.msra.mxu0 0.0
        %1119 = vmatpush.msra.mxu0 0.0
        %1120 = vmatpush.msra.mxu0 0.0
        %1121 = vmatpush.msra.mxu0 0.0
        %1122 = vmatpush.msra.mxu0 0.0
        %1123 = vmatpush.msra.mxu0 0.0
        %1124 = vmatpush.msra.mxu0 0.0
        %1125 = vmatpush.msra.mxu0 %v1105
        %1126 = vmatmul.f32.gmra.mxu0 %v1102
        %v1127 = vpop.f32.mrf.mxu0
        %v1128 = vadd.f32 0.0, %v1127
        %1129 = vdwg.mxu0
        %1130 = vmatpush.msra.mxu0 0.0
        %1131 = vmatpush.msra.mxu0 0.0
        %1132 = vmatpush.msra.mxu0 0.0
        %1133 = vmatpush.msra.mxu0 0.0
        %1134 = vmatpush.msra.mxu0 0.0
        %1135 = vmatpush.msra.mxu0 0.0
        %1136 = vmatpush.msra.mxu0 0.0
        %1137 = vmatpush.msra.mxu0 0.0
        %1138 = vmatpush.msra.mxu0 0.0
        %1139 = vmatpush.msra.mxu0 0.0
        %1140 = vmatpush.msra.mxu0 0.0
        %1141 = vmatpush.msra.mxu0 0.0
        %1142 = vmatpush.msra.mxu0 0.0
        %1143 = vmatpush.msra.mxu0 0.0
        %1144 = vmatpush.msra.mxu0 0.0
        %1145 = vmatpush.msra.mxu0 %v1108
        %1146 = vmatmul.f32.gmra.mxu0 %v1102
        %v1147 = vpop.f32.mrf.mxu0
        %v1148 = vadd.f32 0.0, %v1147
        %1149 = vdwg.mxu0
        %v1150 = vadd.f32 %v1055, %v1128
        %v1151 = vadd.f32 %v1075, %v1148
        %v1152 = vld [vmem:[#allocation2] sm:$0xff]
        %v1153 = vld [vmem:[#allocation2 + $0x8] sm:$0xf]
        %1156 = vst [vmem:[#allocation1] ss:$2 sm:$0xff] %v1152
        %s1157 = scalar_lea.vmem [#allocation1], 16
        %1158 = vst [vmem:[%s1157] ss:$2 sm:$0xff] %v1153
        %v1159 = vld.sshfl [vmem:[#allocation1] sm:$0xff pattern:$0x75316420]
        %v1160 = vld.sshfl [vmem:[#allocation1 + $0x8] sm:$0xff pattern:$0x75316420]
        %v1161 = vld.sshfl [vmem:[#allocation1 + $0x10] sm:$0xff pattern:$0x75316420]
        %1162 = vrot.lane.b32.xlu0 %v1159, 1
        %v1163 = vpop.permute.xlu0 %1162
        %1164 = vrot.lane.b32.xlu0 %v1160, 1
        %v1165 = vpop.permute.xlu0 %1164
        %1166 = vrot.lane.b32.xlu0 %v1161, 1
        %v1167 = vpop.permute.xlu0 %1166
        %v1168 = vsel %vm504, %v1163, %v1165
        %v1169 = vsel %vm504, %v1165, %v1167
        %v1172 = vsel %vm265, %v1168, 0.0
        %v1173 = vsel %vm266, %v1169, 0.0
        %s1174 = scalar_lea.vmem %s3, 12
        %v1175 = vld [vmem:[%s1174] sm:$0xf]
        %v1177 = vsel %vm310, %v1175, 0
        %v1180 = vsel %vm314, %v1172, 0
        %v1183 = vsel %vm314, %v1173, 0
        %1185 = vmatpush.msra.mxu0 0.0
        %1186 = vmatpush.msra.mxu0 0.0
        %1187 = vmatpush.msra.mxu0 0.0
        %1188 = vmatpush.msra.mxu0 0.0
        %1189 = vmatpush.msra.mxu0 0.0
        %1190 = vmatpush.msra.mxu0 0.0
        %1191 = vmatpush.msra.mxu0 0.0
        %1192 = vmatpush.msra.mxu0 0.0
        %1193 = vmatpush.msra.mxu0 0.0
        %1194 = vmatpush.msra.mxu0 0.0
        %1195 = vmatpush.msra.mxu0 0.0
        %1196 = vmatpush.msra.mxu0 0.0
        %1197 = vmatpush.msra.mxu0 0.0
        %1198 = vmatpush.msra.mxu0 0.0
        %1199 = vmatpush.msra.mxu0 0.0
        %1200 = vmatpush.msra.mxu0 %v1180
        %1201 = vmatmul.f32.gmra.mxu0 %v1177
        %v1202 = vpop.f32.mrf.mxu0
        %v1203 = vadd.f32 0.0, %v1202
        %1204 = vdwg.mxu0
        %1205 = vmatpush.msra.mxu0 0.0
        %1206 = vmatpush.msra.mxu0 0.0
        %1207 = vmatpush.msra.mxu0 0.0
        %1208 = vmatpush.msra.mxu0 0.0
        %1209 = vmatpush.msra.mxu0 0.0
        %1210 = vmatpush.msra.mxu0 0.0
        %1211 = vmatpush.msra.mxu0 0.0
        %1212 = vmatpush.msra.mxu0 0.0
        %1213 = vmatpush.msra.mxu0 0.0
        %1214 = vmatpush.msra.mxu0 0.0
        %1215 = vmatpush.msra.mxu0 0.0
        %1216 = vmatpush.msra.mxu0 0.0
        %1217 = vmatpush.msra.mxu0 0.0
        %1218 = vmatpush.msra.mxu0 0.0
        %1219 = vmatpush.msra.mxu0 0.0
        %1220 = vmatpush.msra.mxu0 %v1183
        %1221 = vmatmul.f32.gmra.mxu0 %v1177
        %v1222 = vpop.f32.mrf.mxu0
        %v1223 = vadd.f32 0.0, %v1222
        %1224 = vdwg.mxu0
        %v1225 = vadd.f32 %v1150, %v1203
        %v1226 = vadd.f32 %v1151, %v1223
        %v1227 = vld [vmem:[#allocation2 + $0x4] sm:$0xff]
        %s1228 = scalar_lea.vmem %s3, 16
        %v1229 = vld [vmem:[%s1228] sm:$0xf]
        %1231 = vst [vmem:[#allocation1] ss:$2 sm:$0xff] %v1227
        %v1232 = vld.sshfl [vmem:[#allocation1] sm:$0xff pattern:$0x75316420]
        %v1233 = vld.sshfl [vmem:[#allocation1 + $0x8] sm:$0xff pattern:$0x75316420]
        %v1235 = vsel %vm310, %v1229, 0
        %v1237 = vsel %vm314, %v1232, 0
        %v1239 = vsel %vm314, %v1233, 0
        %1241 = vmatpush.msra.mxu0 0.0
        %1242 = vmatpush.msra.mxu0 0.0
        %1243 = vmatpush.msra.mxu0 0.0
        %1244 = vmatpush.msra.mxu0 0.0
        %1245 = vmatpush.msra.mxu0 0.0
        %1246 = vmatpush.msra.mxu0 0.0
        %1247 = vmatpush.msra.mxu0 0.0
        %1248 = vmatpush.msra.mxu0 0.0
        %1249 = vmatpush.msra.mxu0 0.0
        %1250 = vmatpush.msra.mxu0 0.0
        %1251 = vmatpush.msra.mxu0 0.0
        %1252 = vmatpush.msra.mxu0 0.0
        %1253 = vmatpush.msra.mxu0 0.0
        %1254 = vmatpush.msra.mxu0 0.0
        %1255 = vmatpush.msra.mxu0 0.0
        %1256 = vmatpush.msra.mxu0 %v1237
        %1257 = vmatmul.f32.gmra.mxu0 %v1235
        %v1258 = vpop.f32.mrf.mxu0
        %v1259 = vadd.f32 0.0, %v1258
        %1260 = vdwg.mxu0
        %1261 = vmatpush.msra.mxu0 0.0
        %1262 = vmatpush.msra.mxu0 0.0
        %1263 = vmatpush.msra.mxu0 0.0
        %1264 = vmatpush.msra.mxu0 0.0
        %1265 = vmatpush.msra.mxu0 0.0
        %1266 = vmatpush.msra.mxu0 0.0
        %1267 = vmatpush.msra.mxu0 0.0
        %1268 = vmatpush.msra.mxu0 0.0
        %1269 = vmatpush.msra.mxu0 0.0
        %1270 = vmatpush.msra.mxu0 0.0
        %1271 = vmatpush.msra.mxu0 0.0
        %1272 = vmatpush.msra.mxu0 0.0
        %1273 = vmatpush.msra.mxu0 0.0
        %1274 = vmatpush.msra.mxu0 0.0
        %1275 = vmatpush.msra.mxu0 0.0
        %1276 = vmatpush.msra.mxu0 %v1239
        %1277 = vmatmul.f32.gmra.mxu0 %v1235
        %v1278 = vpop.f32.mrf.mxu0
        %v1279 = vadd.f32 0.0, %v1278
        %1280 = vdwg.mxu0
        %v1281 = vadd.f32 %v1225, %v1259
        %v1282 = vadd.f32 %v1226, %v1279
        %v1283 = vld [vmem:[#allocation2 + $0x4] sm:$0xff]
        %v1284 = vld [vmem:[#allocation2 + $0xc] sm:$0xf]
        %1287 = vst [vmem:[#allocation1] ss:$2 sm:$0xff] %v1283
        %s1288 = scalar_lea.vmem [#allocation1], 16
        %1289 = vst [vmem:[%s1288] ss:$2 sm:$0xff] %v1284
        %v1290 = vld.sshfl [vmem:[#allocation1] sm:$0xff pattern:$0x75316420]
        %v1291 = vld.sshfl [vmem:[#allocation1 + $0x8] sm:$0xff pattern:$0x75316420]
        %v1292 = vld.sshfl [vmem:[#allocation1 + $0x10] sm:$0xff pattern:$0x75316420]
        %1293 = vrot.lane.b32.xlu0 %v1290, 127
        %v1294 = vpop.permute.xlu0 %1293
        %1295 = vrot.lane.b32.xlu0 %v1291, 127
        %v1296 = vpop.permute.xlu0 %1295
        %1297 = vrot.lane.b32.xlu0 %v1292, 127
        %v1298 = vpop.permute.xlu0 %1297
        %v1299 = vsel %vm636, %v1294, %v1296
        %v1300 = vsel %vm636, %v1296, %v1298
        %v1303 = vsel %vm412, %v1299, 0.0
        %v1304 = vsel %vm413, %v1300, 0.0
        %s1305 = scalar_lea.vmem %s3, 20
        %v1306 = vld [vmem:[%s1305] sm:$0xf]
        %v1308 = vsel %vm310, %v1306, 0
        %v1311 = vsel %vm314, %v1303, 0
        %v1314 = vsel %vm314, %v1304, 0
        %1316 = vmatpush.msra.mxu0 0.0
        %1317 = vmatpush.msra.mxu0 0.0
        %1318 = vmatpush.msra.mxu0 0.0
        %1319 = vmatpush.msra.mxu0 0.0
        %1320 = vmatpush.msra.mxu0 0.0
        %1321 = vmatpush.msra.mxu0 0.0
        %1322 = vmatpush.msra.mxu0 0.0
        %1323 = vmatpush.msra.mxu0 0.0
        %1324 = vmatpush.msra.mxu0 0.0
        %1325 = vmatpush.msra.mxu0 0.0
        %1326 = vmatpush.msra.mxu0 0.0
        %1327 = vmatpush.msra.mxu0 0.0
        %1328 = vmatpush.msra.mxu0 0.0
        %1329 = vmatpush.msra.mxu0 0.0
        %1330 = vmatpush.msra.mxu0 0.0
        %1331 = vmatpush.msra.mxu0 %v1311
        %1332 = vmatmul.f32.gmra.mxu0 %v1308
        %v1333 = vpop.f32.mrf.mxu0
        %v1334 = vadd.f32 0.0, %v1333
        %1335 = vdwg.mxu0
        %1336 = vmatpush.msra.mxu0 0.0
        %1337 = vmatpush.msra.mxu0 0.0
        %1338 = vmatpush.msra.mxu0 0.0
        %1339 = vmatpush.msra.mxu0 0.0
        %1340 = vmatpush.msra.mxu0 0.0
        %1341 = vmatpush.msra.mxu0 0.0
        %1342 = vmatpush.msra.mxu0 0.0
        %1343 = vmatpush.msra.mxu0 0.0
        %1344 = vmatpush.msra.mxu0 0.0
        %1345 = vmatpush.msra.mxu0 0.0
        %1346 = vmatpush.msra.mxu0 0.0
        %1347 = vmatpush.msra.mxu0 0.0
        %1348 = vmatpush.msra.mxu0 0.0
        %1349 = vmatpush.msra.mxu0 0.0
        %1350 = vmatpush.msra.mxu0 0.0
        %1351 = vmatpush.msra.mxu0 %v1314
        %1352 = vmatmul.f32.gmra.mxu0 %v1308
        %v1353 = vpop.f32.mrf.mxu0
        %v1354 = vadd.f32 0.0, %v1353
        %1355 = vdwg.mxu0
        %v1356 = vadd.f32 %v1281, %v1334
        %v1357 = vadd.f32 %v1282, %v1354
        %v1358 = vld [vmem:[#allocation2 + $0x4] sm:$0xff]
        %v1359 = vld [vmem:[#allocation2 + $0xc] sm:$0xf]
        %1362 = vst [vmem:[#allocation1] ss:$2 sm:$0xff] %v1358
        %s1363 = scalar_lea.vmem [#allocation1], 16
        %1364 = vst [vmem:[%s1363] ss:$2 sm:$0xff] %v1359
        %v1365 = vld.sshfl [vmem:[#allocation1] sm:$0xff pattern:$0x75316420]
        %v1366 = vld.sshfl [vmem:[#allocation1 + $0x8] sm:$0xff pattern:$0x75316420]
        %v1367 = vld.sshfl [vmem:[#allocation1 + $0x10] sm:$0xff pattern:$0x75316420]
        %1368 = vrot.lane.b32.xlu0 %v1365, 113
        %v1369 = vpop.permute.xlu0 %1368
        %1370 = vrot.lane.b32.xlu0 %v1366, 113
        %v1371 = vpop.permute.xlu0 %1370
        %1372 = vrot.lane.b32.xlu0 %v1367, 113
        %v1373 = vpop.permute.xlu0 %1372
        %v1374 = vsel %vm712, %v1369, %v1371
        %v1375 = vsel %vm712, %v1371, %v1373
        %v1378 = vsel %vm265, %v1374, 0.0
        %v1379 = vsel %vm266, %v1375, 0.0
        %s1380 = scalar_lea.vmem %s3, 24
        %v1381 = vld [vmem:[%s1380] sm:$0xf]
        %v1383 = vsel %vm310, %v1381, 0
        %v1386 = vsel %vm314, %v1378, 0
        %v1389 = vsel %vm314, %v1379, 0
        %1391 = vmatpush.msra.mxu0 0.0
        %1392 = vmatpush.msra.mxu0 0.0
        %1393 = vmatpush.msra.mxu0 0.0
        %1394 = vmatpush.msra.mxu0 0.0
        %1395 = vmatpush.msra.mxu0 0.0
        %1396 = vmatpush.msra.mxu0 0.0
        %1397 = vmatpush.msra.mxu0 0.0
        %1398 = vmatpush.msra.mxu0 0.0
        %1399 = vmatpush.msra.mxu0 0.0
        %1400 = vmatpush.msra.mxu0 0.0
        %1401 = vmatpush.msra.mxu0 0.0
        %1402 = vmatpush.msra.mxu0 0.0
        %1403 = vmatpush.msra.mxu0 0.0
        %1404 = vmatpush.msra.mxu0 0.0
        %1405 = vmatpush.msra.mxu0 0.0
        %1406 = vmatpush.msra.mxu0 %v1386
        %1407 = vmatmul.f32.gmra.mxu0 %v1383
        %v1408 = vpop.f32.mrf.mxu0
        %v1409 = vadd.f32 0.0, %v1408
        %1410 = vdwg.mxu0
        %1411 = vmatpush.msra.mxu0 0.0
        %1412 = vmatpush.msra.mxu0 0.0
        %1413 = vmatpush.msra.mxu0 0.0
        %1414 = vmatpush.msra.mxu0 0.0
        %1415 = vmatpush.msra.mxu0 0.0
        %1416 = vmatpush.msra.mxu0 0.0
        %1417 = vmatpush.msra.mxu0 0.0
        %1418 = vmatpush.msra.mxu0 0.0
        %1419 = vmatpush.msra.mxu0 0.0
        %1420 = vmatpush.msra.mxu0 0.0
        %1421 = vmatpush.msra.mxu0 0.0
        %1422 = vmatpush.msra.mxu0 0.0
        %1423 = vmatpush.msra.mxu0 0.0
        %1424 = vmatpush.msra.mxu0 0.0
        %1425 = vmatpush.msra.mxu0 0.0
        %1426 = vmatpush.msra.mxu0 %v1389
        %1427 = vmatmul.f32.gmra.mxu0 %v1383
        %v1428 = vpop.f32.mrf.mxu0
        %v1429 = vadd.f32 0.0, %v1428
        %1430 = vdwg.mxu0
        %v1431 = vadd.f32 %v1356, %v1409
        %v1432 = vadd.f32 %v1357, %v1429
        %v1433 = vld [vmem:[#allocation2 + $0x4] sm:$0xff]
        %v1434 = vld [vmem:[#allocation2 + $0xc] sm:$0xf]
        %s1435 = scalar_lea.vmem %s3, 28
        %v1436 = vld [vmem:[%s1435] sm:$0xf]
        %1439 = vst [vmem:[#allocation1] ss:$2 sm:$0xff] %v1433
        %s1440 = scalar_lea.vmem [#allocation1], 16
        %1441 = vst [vmem:[%s1440] ss:$2 sm:$0xff] %v1434
        %v1442 = vld.sshfl [vmem:[#allocation1] sm:$0xff pattern:$0x75316420]
        %v1443 = vld.sshfl [vmem:[#allocation1 + $0x8] sm:$0xff pattern:$0x75316420]
        %v1444 = vld.sshfl [vmem:[#allocation1 + $0x10] sm:$0xff pattern:$0x75316420]
        %1445 = vrot.lane.b32.xlu0 %v1442, 112
        %v1446 = vpop.permute.xlu0 %1445
        %1447 = vrot.lane.b32.xlu0 %v1443, 112
        %v1448 = vpop.permute.xlu0 %1447
        %1449 = vrot.lane.b32.xlu0 %v1444, 112
        %v1450 = vpop.permute.xlu0 %1449
        %v1451 = vsel %vm790, %v1446, %v1448
        %v1452 = vsel %vm790, %v1448, %v1450
        %v1454 = vsel %vm310, %v1436, 0
        %v1456 = vsel %vm314, %v1451, 0
        %v1458 = vsel %vm314, %v1452, 0
        %1460 = vmatpush.msra.mxu0 0.0
        %1461 = vmatpush.msra.mxu0 0.0
        %1462 = vmatpush.msra.mxu0 0.0
        %1463 = vmatpush.msra.mxu0 0.0
        %1464 = vmatpush.msra.mxu0 0.0
        %1465 = vmatpush.msra.mxu0 0.0
        %1466 = vmatpush.msra.mxu0 0.0
        %1467 = vmatpush.msra.mxu0 0.0
        %1468 = vmatpush.msra.mxu0 0.0
        %1469 = vmatpush.msra.mxu0 0.0
        %1470 = vmatpush.msra.mxu0 0.0
        %1471 = vmatpush.msra.mxu0 0.0
        %1472 = vmatpush.msra.mxu0 0.0
        %1473 = vmatpush.msra.mxu0 0.0
        %1474 = vmatpush.msra.mxu0 0.0
        %1475 = vmatpush.msra.mxu0 %v1456
        %1476 = vmatmul.f32.gmra.mxu0 %v1454
        %v1477 = vpop.f32.mrf.mxu0
        %v1478 = vadd.f32 0.0, %v1477
        %1479 = vdwg.mxu0
        %1480 = vmatpush.msra.mxu0 0.0
        %1481 = vmatpush.msra.mxu0 0.0
        %1482 = vmatpush.msra.mxu0 0.0
        %1483 = vmatpush.msra.mxu0 0.0
        %1484 = vmatpush.msra.mxu0 0.0
        %1485 = vmatpush.msra.mxu0 0.0
        %1486 = vmatpush.msra.mxu0 0.0
        %1487 = vmatpush.msra.mxu0 0.0
        %1488 = vmatpush.msra.mxu0 0.0
        %1489 = vmatpush.msra.mxu0 0.0
        %1490 = vmatpush.msra.mxu0 0.0
        %1491 = vmatpush.msra.mxu0 0.0
        %1492 = vmatpush.msra.mxu0 0.0
        %1493 = vmatpush.msra.mxu0 0.0
        %1494 = vmatpush.msra.mxu0 0.0
        %1495 = vmatpush.msra.mxu0 %v1458
        %1496 = vmatmul.f32.gmra.mxu0 %v1454
        %v1497 = vpop.f32.mrf.mxu0
        %v1498 = vadd.f32 0.0, %v1497
        %1499 = vdwg.mxu0
        %v1500 = vadd.f32 %v1431, %v1478
        %v1501 = vadd.f32 %v1432, %v1498
        %v1502 = vld [vmem:[#allocation2 + $0x4] sm:$0xff]
        %v1503 = vld [vmem:[#allocation2 + $0xc] sm:$0xf]
        %1506 = vst [vmem:[#allocation1] ss:$2 sm:$0xff] %v1502
        %s1507 = scalar_lea.vmem [#allocation1], 16
        %1508 = vst [vmem:[%s1507] ss:$2 sm:$0xff] %v1503
        %v1509 = vld.sshfl [vmem:[#allocation1] sm:$0xff pattern:$0x75316420]
        %v1510 = vld.sshfl [vmem:[#allocation1 + $0x8] sm:$0xff pattern:$0x75316420]
        %v1511 = vld.sshfl [vmem:[#allocation1 + $0x10] sm:$0xff pattern:$0x75316420]
        %1512 = vrot.lane.b32.xlu0 %v1509, 111
        %v1513 = vpop.permute.xlu0 %1512
        %1514 = vrot.lane.b32.xlu0 %v1510, 111
        %v1515 = vpop.permute.xlu0 %1514
        %1516 = vrot.lane.b32.xlu0 %v1511, 111
        %v1517 = vpop.permute.xlu0 %1516
        %v1518 = vsel %vm858, %v1513, %v1515
        %v1519 = vsel %vm858, %v1515, %v1517
        %v1522 = vsel %vm412, %v1518, 0.0
        %v1523 = vsel %vm413, %v1519, 0.0
        %s1524 = scalar_lea.vmem %s3, 32
        %v1525 = vld [vmem:[%s1524] sm:$0xf]
        %v1527 = vsel %vm310, %v1525, 0
        %v1530 = vsel %vm314, %v1522, 0
        %v1533 = vsel %vm314, %v1523, 0
        %1535 = vmatpush.msra.mxu0 0.0
        %1536 = vmatpush.msra.mxu0 0.0
        %1537 = vmatpush.msra.mxu0 0.0
        %1538 = vmatpush.msra.mxu0 0.0
        %1539 = vmatpush.msra.mxu0 0.0
        %1540 = vmatpush.msra.mxu0 0.0
        %1541 = vmatpush.msra.mxu0 0.0
        %1542 = vmatpush.msra.mxu0 0.0
        %1543 = vmatpush.msra.mxu0 0.0
        %1544 = vmatpush.msra.mxu0 0.0
        %1545 = vmatpush.msra.mxu0 0.0
        %1546 = vmatpush.msra.mxu0 0.0
        %1547 = vmatpush.msra.mxu0 0.0
        %1548 = vmatpush.msra.mxu0 0.0
        %1549 = vmatpush.msra.mxu0 0.0
        %1550 = vmatpush.msra.mxu0 %v1530
        %1551 = vmatmul.f32.gmra.mxu0 %v1527
        %v1552 = vpop.f32.mrf.mxu0
        %v1553 = vadd.f32 0.0, %v1552
        %1554 = vdwg.mxu0
        %1555 = vmatpush.msra.mxu0 0.0
        %1556 = vmatpush.msra.mxu0 0.0
        %1557 = vmatpush.msra.mxu0 0.0
        %1558 = vmatpush.msra.mxu0 0.0
        %1559 = vmatpush.msra.mxu0 0.0
        %1560 = vmatpush.msra.mxu0 0.0
        %1561 = vmatpush.msra.mxu0 0.0
        %1562 = vmatpush.msra.mxu0 0.0
        %1563 = vmatpush.msra.mxu0 0.0
        %1564 = vmatpush.msra.mxu0 0.0
        %1565 = vmatpush.msra.mxu0 0.0
        %1566 = vmatpush.msra.mxu0 0.0
        %1567 = vmatpush.msra.mxu0 0.0
        %1568 = vmatpush.msra.mxu0 0.0
        %1569 = vmatpush.msra.mxu0 0.0
        %1570 = vmatpush.msra.mxu0 %v1533
        %1571 = vmatmul.f32.gmra.mxu0 %v1527
        %v1572 = vpop.f32.mrf.mxu0
        %v1573 = vadd.f32 0.0, %v1572
        %1574 = vdwg.mxu0
        %v1575 = vadd.f32 %v1500, %v1553
        %v1576 = vadd.f32 %v1501, %v1573
        %v1577 = vld [vmem:[%s4] sm:$0xf]
        %1579 = vset.pattern.permute.xlu0 0
        %1580 = vperm.xlu0 %1579, %v1577
        %v1581 = vpop.permute.xlu0 %1580
        %v1583 = vadd.f32 %v1575, %v1581
        %v1584 = vadd.f32 %v1576, %v1581
        %v1587 = vrot.slane %v1584, 4
        %v1588 = vsel %vm314, %v1583, %v1587
        %v1590 = vadd.f32 %v223, %v1588
        %1591 = vst [vmem:[%s217] sm:$0xff] %v1590
        %s1592 = sand.u32 %s137, 1
        %s1593 = scalar_lea.sflag [#allocation4], %s1592
        %s1594 = sand.u32 %s137, 1
        %s1595 = smul.addr %s1594, 8
        %s1596 = scalar_lea.vmem [#allocation3], %s1595
        // Predicated region
        $region41: #{tpu_custom_call.1} parent=39 // pred_check
          %p1597 = pneg %p147
        $region42: #{tpu_custom_call.1} parent=39 // pred_check_branch
          %1599 = sbr.rel (%p1597) target = $region44
        $region43: #{tpu_custom_call.1} parent=39 // pred_region
          %1601 = vsyncadd %s1593, 0
          %s1602 = smul.addr %s19, 2
          %s1603 = smul.addr %s1602, 4
          %s1604 = scalar_lea.hbm %s5, %s1603
          %s1606 = sshll.u32 %s1596, 4
          %s1607 = int_to_ptr.vmem [resolvable:$true] %s1606
          %s1608 = sshll.u32 %s1604, 4
          %s1609 = int_to_ptr.hbm [resolvable:$true] %s1608
          %1611 = dma.vmem_to_hbm [thread:$0]  %s1607, 128, %s1609, %s1593
        $region44: #{tpu_custom_call.1} parent=39 // pred_fallthru
          _
      $region40: #{tpu_custom_call.1} parent=5 // pred_fallthru
        _
      %p1612 = scmp.le.s32.totalorder 2, %s14
      // Predicated region
      $region45: #{tpu_custom_call.1} parent=5 // pred_check
        %p1613 = pneg %p1612
      $region46: #{tpu_custom_call.1} parent=5 // pred_check_branch
        %1615 = sbr.rel (%p1613) target = $region48
      $region47: #{tpu_custom_call.1} parent=5 // pred_region
        %s1616 = ssub.s32 %s14, 2
        // Predicated region
        $region49: #{tpu_custom_call.1} parent=47 // pred_check
          %p1617 = pneg %p153
        $region50: #{tpu_custom_call.1} parent=47 // pred_check_branch
          %1619 = sbr.rel (%p1617) target = $region52
        $region51: #{tpu_custom_call.1} parent=47 // pred_region
          %s1620 = sand.u32 %s138, 1
          %s1621 = scalar_lea.sflag [#allocation4], %s1620
          %s1622 = sand.u32 %s138, 1
          %s1623 = smul.addr %s1622, 8
          %s1624 = scalar_lea.vmem [#allocation3], %s1623
          %1626 = dma.done %s1621, 128
        $region52: #{tpu_custom_call.1} parent=47 // pred_fallthru
          _
      $region48: #{tpu_custom_call.1} parent=5 // pred_fallthru
        _
    $region6: #{tpu_custom_call.1} parent=1 // loop_footer
      %s18 = sadd.s32 1, %s14
    $region7: #{tpu_custom_call.1} parent=1 // loop_footer_branch
      %13 = sbr.rel target = $region3
    $region8: #{tpu_custom_call.1} parent=1 // loop_exit
      _
    %1627 = vsyncpa [#allocation4], 1
    %s1628 = scalar_lea.sflag [#allocation4], 1
    %1629 = vsyncpa %s1628, 1

</llo_original>
